<compile_context>
chip_gen: v7x
topology: tpu7x:2x2x1
jax: 0.10.0
libtpu: 0.0.40
codegen_flags: <defaults>
</compile_context>

<pallas_src>
import jax
import jax.numpy as jnp
from jax import lax
from jax.experimental import pallas as pl
from jax.experimental.pallas import tpu as pltpu


_TILE_F32_BYTES = 2 * 1024 * 1024      # cap on per-tile f32 compute footprint (~2 MiB)
_MIN_ELEMS_FOR_PALLAS = 16384          # below this, fused XLA beats kernel-launch overhead
_VMEM_LIMIT_BYTES = 48 * 1024 * 1024   # < v7x's 64 MiB physical; raises v5e's 16 MiB default


def _round_up(x: int, m: int) -> int:
    return (x + m - 1) // m * m


def _round_down(x: int, m: int) -> int:
    return x // m * m


def _make_masked_kl_kernel(*, fold: int, rows_per_block: int,
                           blocks_per_shard: int, n_valid_rows: int):
    """Builds the kernel body. `fold > 1` means rows were folded into lanes and the
    mask must be expanded across each row's C lanes (done via a tiny MXU matmul)."""

    def kernel(*refs):
        if fold > 1:
            lp_ref, tg_ref, m_ref, e_ref, out_ref = refs
        else:
            lp_ref, tg_ref, m_ref, out_ref = refs
            e_ref = None

        c = pl.program_id(0)     # shard (parallel axis; maps to a TensorCore on v7x)
        i = pl.program_id(1)     # row-block within the shard (reduction axis)

        @pl.when(i == 0)
        def _():
            out_ref[...] = jnp.zeros_like(out_ref)

        m = m_ref[...].astype(jnp.float32)                       # (R, fold_k)
        if fold > 1:
            # Expand per-original-row mask across its C lanes:  m_full[r, j] = m[r, j // C].
            # Done as (R, fold_k) @ (fold_k, C_eff) on the otherwise-idle MXU.
            m_full = jnp.dot(m, e_ref[...], preferred_element_type=jnp.float32)
        else:
            m_full = m                                           # (R, 1): lane-broadcasts below

        lp = lp_ref[...].astype(jnp.float32) * m_full            # (R, C_eff) masked log-preds
        tg = tg_ref[...].astype(jnp.float32) * m_full            # (R, C_eff) masked targets

        # KLDivLoss(reduction='sum') elementwise term: xlogy(t, t) - t * input.
        pos = tg > 0.0
        contrib = jnp.where(pos, tg * jnp.log(jnp.where(pos, tg, 1.0)), 0.0) - tg * lp

        # Ragged-tail / redundant-block masking: SELECT (not multiply) so undefined
        # out-of-bounds data cannot propagate inf/nan into the sum.
        blk = c * blocks_per_shard + i
        remaining = n_valid_rows - blk * rows_per_block          # may be <=0 or > R
        row_ids = lax.broadcasted_iota(jnp.int32, (contrib.shape[0], 1), 0)
        contrib = jnp.where(row_ids < remaining, contrib, 0.0)

        # Vector partial accumulation: reshape is a pure (sublane-group) relabeling and the
        # axis-0 sum is plain vreg adds (VPU only).  Output block is VMEM-resident across i.
        r, ce = contrib.shape
        partial = contrib.reshape(r // 8, 8, ce).sum(axis=0)     # (8, C_eff) f32
        out_ref[...] += partial[None, :, :]

    return kernel


def _reference_masked_kl(log_pred, target, mask):
    """Pure-JAX reference mirroring the PyTorch module (also the small-input fast path)."""
    eps = 1e-6
    m = mask.reshape(-1, 1).astype(jnp.float32)
    lp = log_pred.astype(jnp.float32) * m
    tg = target.astype(jnp.float32) * m
    pos = tg > 0.0
    elem = jnp.where(pos, tg * jnp.log(jnp.where(pos, tg, 1.0)), 0.0) - tg * lp
    return jnp.sum(elem) / jnp.sum(mask.astype(jnp.float32) + eps)


def masked_kl_div_loss(log_pred: jnp.ndarray,
                       target: jnp.ndarray,
                       mask: jnp.ndarray) -> jnp.ndarray:
    """log_pred, target: (N, C); mask: any shape with N elements. Returns scalar loss."""
    N, C = log_pred.shape
    eps = 1e-6

    # Denominator uses the ORIGINAL mask (numel = N), exactly like torch.sum(mask + 1e-6).
    denom = jnp.sum(mask.astype(jnp.float32) + eps)

    itemsize = jnp.dtype(log_pred.dtype).itemsize
    sub = {4: 8, 2: 16, 1: 32}.get(itemsize, 8)          # sublane packing of the input dtype

    # Lane folding: pack `fold` consecutive rows into the 128-lane axis when C is small.
    fold = 1
    if C < 128 and 128 % C == 0 and N % (128 // C) == 0:
        fold = 128 // C
    C_eff = C * fold
    rows = N // fold

    # Small-input fast path (also covers inputs too small to form a single legal tile).
    if N * C < _MIN_ELEMS_FOR_PALLAS or rows < sub:
        return _reference_masked_kl(log_pred, target, mask)

    # Wrapper-side reshapes only (contiguous row-major -> free); no full-tensor padding.
    lp2 = log_pred.reshape(rows, C_eff)
    tg2 = target.reshape(rows, C_eff)
    m2 = mask.reshape(rows, fold).astype(jnp.float32)

    fold_k = fold
    e_mat = None
    if fold > 1:
        # Pad the (tiny) mask's fold axis up to a sublane multiple so the in-kernel mask
        # expansion is a conventional (R, 8k) @ (8k, 128) matmul.  Extra columns are zero.
        fold_k = _round_up(fold, 8)
        if fold_k != fold:
            m2 = jnp.pad(m2, ((0, 0), (0, fold_k - fold)))
        e_mat = ((jnp.arange(C_eff, dtype=jnp.int32) // C)[None, :]
                 == jnp.arange(fold_k, dtype=jnp.int32)[:, None]).astype(jnp.float32)

    # Row-tile sizing: cap the per-tile f32 compute footprint, round to sublane packing.
    r_cap = max(sub, (_TILE_F32_BYTES // (C_eff * 4)) // sub * sub)
    R = min(r_cap, _round_down(rows, sub))
    total_blocks = (rows + R - 1) // R
    last_blk = total_blocks - 1

    # Two row shards so the grid's parallel axis can be split across v7x's 2 TensorCores
    # (runs sequentially, with negligible overhead, on single-core v5e/v6e).
    num_shards = 2 if total_blocks >= 2 else 1
    bpc = (total_blocks + num_shards - 1) // num_shards

    def data_map(c, i):
        # Clamp redundant trailing blocks (odd block counts) onto the last valid block;
        # the kernel zeroes their contribution via the row-validity select.
        return (jnp.minimum(c * bpc + i, last_blk), 0)

    in_specs = [
        pl.BlockSpec((R, C_eff), data_map),            # log_pred rows
        pl.BlockSpec((R, C_eff), data_map),            # target rows
        pl.BlockSpec((R, fold_k), data_map),           # per-row mask (folded, tiny)
    ]
    args = [lp2, tg2, m2]
    if fold > 1:
        in_specs.append(pl.BlockSpec((fold_k, C_eff), lambda c, i: (0, 0)))  # constant expander
        args.append(e_mat)

    kernel = _make_masked_kl_kernel(
        fold=fold, rows_per_block=R, blocks_per_shard=bpc, n_valid_rows=rows)

    partials = pl.pallas_call(
        kernel,
        out_shape=jax.ShapeDtypeStruct((num_shards, 8, C_eff), jnp.float32),
        grid_spec=pltpu.PrefetchScalarGridSpec(
            num_scalar_prefetch=0,
            grid=(num_shards, bpc),
            in_specs=in_specs,
            out_specs=pl.BlockSpec((1, 8, C_eff), lambda c, i: (c, 0, 0)),
        ),
        compiler_params=pltpu.CompilerParams(
            dimension_semantics=("parallel", "arbitrary"),
            vmem_limit_bytes=_VMEM_LIMIT_BYTES,
        ),
    )(*args)

    return jnp.sum(partials) / denom


if __name__ == "__main__":
    key = jax.random.PRNGKey(0)
    keys = jax.random.split(key, 10)
    loss_fn = jax.jit(masked_kl_div_loss)

    # --- Primary: batch=2, seq=1000, classes=32 -> (N, C) = (2000, 32). Exercises the
    # Pallas kernel with lane folding (32 -> 128 lanes), a ragged row tail, the 2-shard
    # grid, and a mixed zero / non-binary float mask. ---
    B, T, C = 2, 1000, 32
    N = B * T
    log_pred = jax.nn.log_softmax(jax.random.normal(keys[0], (N, C), jnp.float32), axis=-1)
    target = jax.nn.softmax(jax.random.normal(keys[1], (N, C), jnp.float32), axis=-1)
    keep = jax.random.uniform(keys[2], (N,)) > 0.25
    weights = jax.random.uniform(keys[3], (N,), minval=0.5, maxval=1.5)
    mask = jnp.where(keep, weights, 0.0).astype(jnp.float32)

    loss = jax.block_until_ready(loss_fn(log_pred, target, mask))
    ref = _reference_masked_kl(log_pred, target, mask)
    assert loss.shape == (), f"expected scalar, got {loss.shape}"
    assert bool(jnp.isfinite(loss)), "loss is not finite"
    assert jnp.allclose(loss, ref, rtol=1e-5, atol=1e-6), (float(loss), float(ref))

    # --- Non-folded kernel path: C not a divisor of 128, bf16 inputs, single shard. ---
    N2, C2 = 304, 160
    lp2 = jax.nn.log_softmax(jax.random.normal(keys[4], (N2, C2), jnp.float32),
                             axis=-1).astype(jnp.bfloat16)
    tg2 = jax.nn.softmax(jax.random.normal(keys[5], (N2, C2), jnp.float32),
                         axis=-1).astype(jnp.bfloat16)
    mk2 = (jax.random.uniform(keys[6], (N2,)) > 0.5).astype(jnp.float32)
    loss2 = jax.block_until_ready(loss_fn(lp2, tg2, mk2))
    ref2 = _reference_masked_kl(lp2, tg2, mk2)
    assert bool(jnp.isfinite(loss2)), "bf16-path loss is not finite"
    assert jnp.allclose(loss2, ref2, rtol=1e-4, atol=1e-5), (float(loss2), float(ref2))

    # --- Tiny module-default shape (batch=2, seq=8, hidden=32): fused-XLA fast path. ---
    N3, C3 = 2 * 8, 32
    lp3 = jax.nn.log_softmax(jax.random.normal(keys[7], (N3, C3), jnp.float32), axis=-1)
    tg3 = jax.nn.softmax(jax.random.normal(keys[8], (N3, C3), jnp.float32), axis=-1)
    mk3 = (jax.random.uniform(keys[9], (N3,)) > 0.25).astype(jnp.float32)
    loss3 = jax.block_until_ready(loss_fn(lp3, tg3, mk3))
    assert bool(jnp.isfinite(loss3)), "fast-path loss is not finite"

    print("KERNEL_OK")
</pallas_src>

<mosaic_0001>
module attributes {stable_mosaic.version = 11 : i64} {
  func.func @kernel(%arg0: i32, %arg1: i32, %arg2: memref<496x128xf32, #tpu.memory_space<vmem>>, %arg3: memref<496x128xf32, #tpu.memory_space<vmem>>, %arg4: memref<496x8xf32, #tpu.memory_space<vmem>>, %arg5: memref<8x128xf32, #tpu.memory_space<vmem>>, %arg6: memref<1x8x128xf32, #tpu.memory_space<vmem>>) attributes {dimension_semantics = [#tpu.dimension_semantics<parallel>, #tpu.dimension_semantics<arbitrary>], iteration_bounds = array<i64: 2, 1>, scalar_prefetch = 0 : i64, scratch_operands = 0 : i64, tpu.core_type = #tpu.core_type<tc>, window_params = [{transform_indices = @transform_0, window_bounds = array<i64: 496, 128>}, {transform_indices = @transform_1, window_bounds = array<i64: 496, 128>}, {transform_indices = @transform_2, window_bounds = array<i64: 496, 8>}, {pipeline_mode = #tpu.pipeline_mode<synchronous>, transform_indices = @transform_3, window_bounds = array<i64: 8, 128>}, {transform_indices = @transform_4, window_bounds = array<i64: 1, 8, 128>}]} {
    %c0_i32 = arith.constant 0 : i32
    %0 = arith.cmpi eq, %arg1, %c0_i32 : i32
    %1 = arith.extui %0 : i1 to i32
    %c0_i32_0 = arith.constant 0 : i32
    %2 = arith.cmpi ne, %1, %c0_i32_0 : i32
    scf.if %2 {
      %cst_19 = arith.constant 0.000000e+00 : f32
      %37 = vector.broadcast %cst_19 : f32 to vector<1x8x128xf32>
      %c0_20 = arith.constant 0 : index
      %c0_21 = arith.constant 0 : index
      %c0_22 = arith.constant 0 : index
      %38 = vector.load %arg6[%c0_20, %c0_21, %c0_22] : memref<1x8x128xf32, #tpu.memory_space<vmem>>, vector<1x8x128xf32>
      tpu.vector_store %arg6[%c0_20, %c0_21, %c0_22], %37 {strides = array<i32>} : memref<1x8x128xf32, #tpu.memory_space<vmem>>, vector<1x8x128xf32>,
    } else {
    }
    %c0 = arith.constant 0 : index
    %c0_1 = arith.constant 0 : index
    %3 = vector.load %arg4[%c0, %c0_1] : memref<496x8xf32, #tpu.memory_space<vmem>>, vector<496x8xf32>
    %c0_2 = arith.constant 0 : index
    %c0_3 = arith.constant 0 : index
    %4 = vector.load %arg5[%c0_2, %c0_3] : memref<8x128xf32, #tpu.memory_space<vmem>>, vector<8x128xf32>
    %cst = arith.constant dense<0.000000e+00> : vector<496x128xf32>
    %5 = tpu.matmul %3, %4, %cst {dimension_numbers = #tpu.dot_dimension_numbers<[1], [0], [0], [1], [0, 0, 1, 1], [], []>} : vector<496x8xf32>, vector<8x128xf32>, vector<496x128xf32> -> vector<496x128xf32>
    %c0_4 = arith.constant 0 : index
    %c0_5 = arith.constant 0 : index
    %6 = vector.load %arg2[%c0_4, %c0_5] : memref<496x128xf32, #tpu.memory_space<vmem>>, vector<496x128xf32>
    %7 = arith.mulf %6, %5 : vector<496x128xf32>
    %c0_6 = arith.constant 0 : index
    %c0_7 = arith.constant 0 : index
    %8 = vector.load %arg3[%c0_6, %c0_7] : memref<496x128xf32, #tpu.memory_space<vmem>>, vector<496x128xf32>
    %9 = arith.mulf %8, %5 : vector<496x128xf32>
    %cst_8 = arith.constant 0.000000e+00 : f32
    %10 = vector.broadcast %cst_8 : f32 to vector<496x128xf32>
    %11 = arith.cmpf ogt, %9, %10 : vector<496x128xf32>
    %cst_9 = arith.constant 1.000000e+00 : f32
    %12 = vector.broadcast %cst_9 : f32 to vector<496x128xf32>
    %13 = arith.select %11, %9, %12 : vector<496x128xi1>, vector<496x128xf32>
    %14 = math.log %13 : vector<496x128xf32>
    %15 = arith.mulf %9, %14 : vector<496x128xf32>
    %cst_10 = arith.constant 0.000000e+00 : f32
    %16 = vector.broadcast %cst_10 : f32 to vector<496x128xf32>
    %17 = arith.select %11, %15, %16 : vector<496x128xi1>, vector<496x128xf32>
    %18 = arith.mulf %9, %7 : vector<496x128xf32>
    %19 = arith.subf %17, %18 : vector<496x128xf32>
    %c1_i32 = arith.constant 1 : i32
    %20 = arith.muli %arg0, %c1_i32 : i32
    %21 = arith.addi %20, %arg1 : i32
    %c496_i32 = arith.constant 496 : i32
    %22 = arith.muli %21, %c496_i32 : i32
    %c500_i32 = arith.constant 500 : i32
    %23 = arith.subi %c500_i32, %22 : i32
    %24 = tpu.iota {dimensions = array<i32: 0>} : vector<496x1xi32>
    %25 = vector.broadcast %23 : i32 to vector<496x1xi32>
    %26 = arith.cmpi slt, %24, %25 : vector<496x1xi32>
    %cst_11 = arith.constant 0.000000e+00 : f32
    %27 = vector.shape_cast %26 : vector<496x1xi1> to vector<496x1xi1>
    %28 = vector.broadcast %27 : vector<496x1xi1> to vector<496x128xi1>
    %29 = vector.broadcast %cst_11 : f32 to vector<496x128xf32>
    %30 = arith.select %28, %19, %29 : vector<496x128xi1>, vector<496x128xf32>
    %31 = vector.shape_cast %30 : vector<496x128xf32> to vector<62x8x128xf32>
    %cst_12 = arith.constant dense<0.000000e+00> : vector<8x128xf32>
    %32 = vector.multi_reduction <add>, %31, %cst_12 [0] : vector<62x8x128xf32> to vector<8x128xf32>
    %c0_13 = arith.constant 0 : index
    %c0_14 = arith.constant 0 : index
    %c0_15 = arith.constant 0 : index
    %33 = vector.load %arg6[%c0_13, %c0_14, %c0_15] : memref<1x8x128xf32, #tpu.memory_space<vmem>>, vector<1x8x128xf32>
    %34 = vector.shape_cast %32 : vector<8x128xf32> to vector<1x8x128xf32>
    %35 = arith.addf %33, %34 : vector<1x8x128xf32>
    %c0_16 = arith.constant 0 : index
    %c0_17 = arith.constant 0 : index
    %c0_18 = arith.constant 0 : index
    %36 = vector.load %arg6[%c0_16, %c0_17, %c0_18] : memref<1x8x128xf32, #tpu.memory_space<vmem>>, vector<1x8x128xf32>
    tpu.vector_store %arg6[%c0_16, %c0_17, %c0_18], %35 {strides = array<i32>} : memref<1x8x128xf32, #tpu.memory_space<vmem>>, vector<1x8x128xf32>,
    return
  }
  func.func @transform_0(%arg0: i32, %arg1: i32) -> (i32, i32) {
    %c1_i32 = arith.constant 1 : i32
    %0 = arith.muli %arg0, %c1_i32 : i32
    %1 = arith.addi %0, %arg1 : i32
    %c1_i32_0 = arith.constant 1 : i32
    %2 = arith.minsi %1, %c1_i32_0 : i32
    %c0_i32 = arith.constant 0 : i32
    %c0_i32_1 = arith.constant 0 : i32
    return %2, %c0_i32 : i32, i32
  }
  func.func @transform_1(%arg0: i32, %arg1: i32) -> (i32, i32) {
    %c1_i32 = arith.constant 1 : i32
    %0 = arith.muli %arg0, %c1_i32 : i32
    %1 = arith.addi %0, %arg1 : i32
    %c1_i32_0 = arith.constant 1 : i32
    %2 = arith.minsi %1, %c1_i32_0 : i32
    %c0_i32 = arith.constant 0 : i32
    %c0_i32_1 = arith.constant 0 : i32
    return %2, %c0_i32 : i32, i32
  }
  func.func @transform_2(%arg0: i32, %arg1: i32) -> (i32, i32) {
    %c1_i32 = arith.constant 1 : i32
    %0 = arith.muli %arg0, %c1_i32 : i32
    %1 = arith.addi %0, %arg1 : i32
    %c1_i32_0 = arith.constant 1 : i32
    %2 = arith.minsi %1, %c1_i32_0 : i32
    %c0_i32 = arith.constant 0 : i32
    %c0_i32_1 = arith.constant 0 : i32
    return %2, %c0_i32 : i32, i32
  }
  func.func @transform_3(%arg0: i32, %arg1: i32) -> (i32, i32) {
    %c0_i32 = arith.constant 0 : i32
    %c0_i32_0 = arith.constant 0 : i32
    %c0_i32_1 = arith.constant 0 : i32
    return %c0_i32, %c0_i32_0 : i32, i32
  }
  func.func @transform_4(%arg0: i32, %arg1: i32) -> (i32, i32, i32) {
    %c0_i32 = arith.constant 0 : i32
    %c0_i32_0 = arith.constant 0 : i32
    %c0_i32_1 = arith.constant 0 : i32
    return %arg0, %c0_i32, %c0_i32_0 : i32, i32, i32
  }
}

</mosaic_0001>

<llo_original>
// kernel: masked_kl_div_loss.1
$region0: #{masked_kl_div_loss.1}
  #allocation0 [shape = 'u32[]', space=smem, size = 0x4, offset = 0x4, fixed_abs, tag = 'smem constant byte address 0x4 - core index']
  #allocation1 [shape = 'u32[144,128]{1,0:T(1,128)}', space=vmem, size = 0x12000, scoped, tag = 'internal scratch']
  %s0 = inlined_call_operand.vmem [shape: f32[500,128], index: 0, kind: input, shape index: {}]
  %s1 = inlined_call_operand.vmem [shape: f32[500,128], index: 1, kind: input, shape index: {}]
  %s2 = inlined_call_operand.vmem [shape: f32[500,8], index: 2, kind: input, shape index: {}]
  %s3 = inlined_call_operand.vmem [shape: f32[8,128], index: 3, kind: input, shape index: {}]
  %s4 = inlined_call_operand.vmem [shape: f32[2,8,128], index: 4, kind: output, shape index: {}]
  %s5 = sld [smem:[#allocation0]]
  $region53: #{masked_kl_div_loss.1} parent=0
    _
  %s7 = ssub.s32 1, %s5
  %s8 = scalar_select 0, %s7, %s5
  loop: start=0, step=1, limit=4
  $region2: #{masked_kl_div_loss.1} parent=0 // loop_pre_header
    _
  $region3: #{masked_kl_div_loss.1} parent=0 // loop_header
    %s10 = sphi 0, %s14
    %p11 = scmp.ge.s32.totalorder %s10, 4
    %s17 = sphi 0, %s29
    %s18 = sphi 0, %s25
    %s19 = sphi 0, %s17
    %s20 = sphi 0, %s18
    %s21 = sphi 0, %s19
    %s22 = sphi 0, %s20
    %s38 = sphi 0, %s40
    %s41 = sphi 0, %s38
    %s42 = sphi 0, %s41
    %s58 = sphi 0, %s42
    %s70 = sphi 0, %s72
    %s73 = sphi 0, %s70
    %s74 = sphi 0, %s73
    %s90 = sphi 0, %s74
    %s102 = sphi 0, %s104
    %s105 = sphi 0, %s102
    %s106 = sphi 0, %s105
    %s122 = sphi 0, %s106
    %s126 = sphi 0, %s126
    %s128 = sphi 0, %s126
    %s129 = sphi 0, %s128
    %s143 = sphi 0, %s129
    %s149 = sphi 0, %s151
    %s152 = sphi 0, %s149
    %s153 = sphi 0, %s152
    %s169 = sphi 0, %s153
  $region4: #{masked_kl_div_loss.1} parent=0 // loop_header_branch
    %13 = sbr.rel (%p11) target = $region8
  $region5: #{masked_kl_div_loss.1} parent=0 // loop_body
    %s15 = ssub.s32 %s10, 1
    %s16 = ssub.s32 %s10, 2
    %s23 = sadd.s32 1, %s18
    %p24 = scmp.ge.s32.totalorder %s23, 1
    %s25 = scalar_select %p24, 0, %s23
    %s26 = sadd.s32 1, %s17
    %s27 = scalar_select %p24, %s26, %s17
    %p28 = scmp.ge.s32.totalorder %s27, 2
    %s29 = scalar_select %p28, 0, %s27
    %s30 = sadd.s32 %s17, %s18
    %p31 = scmp.lt.s32.totalorder %s30, 1
    %s32 = scalar_select %p31, %s30, 1
    %s33 = sadd.s32 %s29, %s25
    %p34 = scmp.lt.s32.totalorder %s33, 1
    %s35 = scalar_select %p34, %s33, 1
    %s36 = ssub.s32 %s32, %s35
    %p37 = scmp.eq.s32.totalorder %s36, 0
    %s39 = sadd.s32 %s38, 1
    %s40 = scalar_select %p37, %s38, %s39
    %p43 = pneg %p37
    %p44 = scmp.eq.s32.totalorder %s10, 1
    %p45 = por %p43, %p44
    %p46 = scmp.ne.s32.totalorder %s38, %s41
    %p47 = scmp.eq.s32.totalorder %s10, 0
    %p48 = por %p46, %p47
    %p49 = scmp.ne.s32.totalorder %s38, %s41
    %p50 = scmp.eq.s32.totalorder %s15, 1
    %p51 = por %p49, %p50
    %p52 = scmp.ne.s32.totalorder %s41, %s42
    %p53 = scmp.eq.s32.totalorder %s15, 0
    %p54 = por %p52, %p53
    %p55 = scmp.ne.s32.totalorder %s41, %s42
    %p56 = scmp.eq.s32.totalorder %s16, 1
    %p57 = por %p55, %p56
    %p59 = scmp.ne.s32.totalorder %s42, %s58
    %p60 = scmp.eq.s32.totalorder %s16, 0
    %p61 = por %p59, %p60
    %s62 = sadd.s32 %s17, %s18
    %p63 = scmp.lt.s32.totalorder %s62, 1
    %s64 = scalar_select %p63, %s62, 1
    %s65 = sadd.s32 %s29, %s25
    %p66 = scmp.lt.s32.totalorder %s65, 1
    %s67 = scalar_select %p66, %s65, 1
    %s68 = ssub.s32 %s64, %s67
    %p69 = scmp.eq.s32.totalorder %s68, 0
    %s71 = sadd.s32 %s70, 1
    %s72 = scalar_select %p69, %s70, %s71
    %p75 = pneg %p69
    %p76 = scmp.eq.s32.totalorder %s10, 1
    %p77 = por %p75, %p76
    %p78 = scmp.ne.s32.totalorder %s70, %s73
    %p79 = scmp.eq.s32.totalorder %s10, 0
    %p80 = por %p78, %p79
    %p81 = scmp.ne.s32.totalorder %s70, %s73
    %p82 = scmp.eq.s32.totalorder %s15, 1
    %p83 = por %p81, %p82
    %p84 = scmp.ne.s32.totalorder %s73, %s74
    %p85 = scmp.eq.s32.totalorder %s15, 0
    %p86 = por %p84, %p85
    %p87 = scmp.ne.s32.totalorder %s73, %s74
    %p88 = scmp.eq.s32.totalorder %s16, 1
    %p89 = por %p87, %p88
    %p91 = scmp.ne.s32.totalorder %s74, %s90
    %p92 = scmp.eq.s32.totalorder %s16, 0
    %p93 = por %p91, %p92
    %s94 = sadd.s32 %s17, %s18
    %p95 = scmp.lt.s32.totalorder %s94, 1
    %s96 = scalar_select %p95, %s94, 1
    %s97 = sadd.s32 %s29, %s25
    %p98 = scmp.lt.s32.totalorder %s97, 1
    %s99 = scalar_select %p98, %s97, 1
    %s100 = ssub.s32 %s96, %s99
    %p101 = scmp.eq.s32.totalorder %s100, 0
    %s103 = sadd.s32 %s102, 1
    %s104 = scalar_select %p101, %s102, %s103
    %p107 = pneg %p101
    %p108 = scmp.eq.s32.totalorder %s10, 1
    %p109 = por %p107, %p108
    %p110 = scmp.ne.s32.totalorder %s102, %s105
    %p111 = scmp.eq.s32.totalorder %s10, 0
    %p112 = por %p110, %p111
    %p113 = scmp.ne.s32.totalorder %s102, %s105
    %p114 = scmp.eq.s32.totalorder %s15, 1
    %p115 = por %p113, %p114
    %p116 = scmp.ne.s32.totalorder %s105, %s106
    %p117 = scmp.eq.s32.totalorder %s15, 0
    %p118 = por %p116, %p117
    %p119 = scmp.ne.s32.totalorder %s105, %s106
    %p120 = scmp.eq.s32.totalorder %s16, 1
    %p121 = por %p119, %p120
    %p123 = scmp.ne.s32.totalorder %s106, %s122
    %p124 = scmp.eq.s32.totalorder %s16, 0
    %p125 = por %p123, %p124
    %s127 = sadd.s32 %s126, 1
    %p130 = scmp.eq.s32.totalorder %s10, 1
    %p131 = scmp.ne.s32.totalorder %s126, %s128
    %p132 = scmp.eq.s32.totalorder %s10, 0
    %p133 = por %p131, %p132
    %p134 = scmp.ne.s32.totalorder %s126, %s128
    %p135 = scmp.eq.s32.totalorder %s15, 1
    %p136 = por %p134, %p135
    %p137 = scmp.ne.s32.totalorder %s128, %s129
    %p138 = scmp.eq.s32.totalorder %s15, 0
    %p139 = por %p137, %p138
    %p140 = scmp.ne.s32.totalorder %s128, %s129
    %p141 = scmp.eq.s32.totalorder %s16, 1
    %p142 = por %p140, %p141
    %p144 = scmp.ne.s32.totalorder %s129, %s143
    %p145 = scmp.eq.s32.totalorder %s16, 0
    %p146 = por %p144, %p145
    %s147 = ssub.s32 %s17, %s29
    %p148 = scmp.eq.s32.totalorder %s147, 0
    %s150 = sadd.s32 %s149, 1
    %s151 = scalar_select %p148, %s149, %s150
    %p154 = pneg %p148
    %p155 = scmp.eq.s32.totalorder %s10, 1
    %p156 = por %p154, %p155
    %p157 = scmp.ne.s32.totalorder %s149, %s152
    %p158 = scmp.eq.s32.totalorder %s10, 0
    %p159 = por %p157, %p158
    %p160 = scmp.ne.s32.totalorder %s149, %s152
    %p161 = scmp.eq.s32.totalorder %s15, 1
    %p162 = por %p160, %p161
    %p163 = scmp.ne.s32.totalorder %s152, %s153
    %p164 = scmp.eq.s32.totalorder %s15, 0
    %p165 = por %p163, %p164
    %p166 = scmp.ne.s32.totalorder %s152, %s153
    %p167 = scmp.eq.s32.totalorder %s16, 1
    %p168 = por %p166, %p167
    %p170 = scmp.ne.s32.totalorder %s153, %s169
    %p171 = scmp.eq.s32.totalorder %s16, 0
    %p172 = por %p170, %p171
    %p173 = scmp.le.s32.totalorder 1, %s10
    %p174 = scmp.lt.s32.totalorder %s10, 3
    %p175 = pnand %p173, %p174
    %p176 = pneg %p175
    // Predicated region
    $region9: #{masked_kl_div_loss.1} parent=5 // pred_check
      _
    $region10: #{masked_kl_div_loss.1} parent=5 // pred_check_branch
      %178 = sbr.rel (%p175) target = $region12
    $region11: #{masked_kl_div_loss.1} parent=5 // pred_region
      %s179 = ssub.s32 %s10, 1
      // Predicated region
      $region13: #{masked_kl_div_loss.1} parent=11 // pred_check
        %p180 = pneg %p139
      $region14: #{masked_kl_div_loss.1} parent=11 // pred_check_branch
        %182 = sbr.rel (%p180) target = $region16
      $region15: #{masked_kl_div_loss.1} parent=11 // pred_region
        _
      $region16: #{masked_kl_div_loss.1} parent=11 // pred_fallthru
        _
    $region12: #{masked_kl_div_loss.1} parent=5 // pred_fallthru
      _
    %p183 = scmp.lt.s32.totalorder %s10, 2
    // Predicated region
    $region17: #{masked_kl_div_loss.1} parent=5 // pred_check
      %p184 = pneg %p183
    $region18: #{masked_kl_div_loss.1} parent=5 // pred_check_branch
      %186 = sbr.rel (%p184) target = $region20
    $region19: #{masked_kl_div_loss.1} parent=5 // pred_region
      // Predicated region
      $region21: #{masked_kl_div_loss.1} parent=19 // pred_check
        %p187 = pneg %p48
      $region22: #{masked_kl_div_loss.1} parent=19 // pred_check_branch
        %189 = sbr.rel (%p187) target = $region24
      $region23: #{masked_kl_div_loss.1} parent=19 // pred_region
        %s190 = sadd.s32 %s17, %s18
        %p191 = scmp.lt.s32.totalorder %s190, 1
        %s192 = scalar_select %p191, %s190, 1
        %s193 = smul.u32 62, %s192
        %s194 = ssub.s32 63, %s193
        %p195 = scmp.lt.s32.totalorder %s194, 62
        %s196 = scalar_select %p195, %s194, 62
        %s197 = smul.u32 128, %s196
        %p198 = scmp.lt.s32.totalorder %s193, 62
        %s199 = scalar_select %p198, %s193, 62
        %s200 = smul.addr %s199, 8
        %s201 = scalar_lea.vmem %s0, %s200
        %s202 = sadd.s32 %s17, %s18
        %p203 = scmp.lt.s32.totalorder %s202, 1
        %s204 = scalar_select %p203, %s202, 1
        %s205 = smul.u32 62, %s204
        %s206 = ssub.s32 63, %s205
        %p207 = scmp.lt.s32.totalorder %s206, 62
        %s208 = scalar_select %p207, %s206, 62
        %s209 = smul.u32 128, %s208
      $region24: #{masked_kl_div_loss.1} parent=19 // pred_fallthru
        _
      // Predicated region
      $region25: #{masked_kl_div_loss.1} parent=19 // pred_check
        %p210 = pneg %p80
      $region26: #{masked_kl_div_loss.1} parent=19 // pred_check_branch
        %212 = sbr.rel (%p210) target = $region28
      $region27: #{masked_kl_div_loss.1} parent=19 // pred_region
        %s213 = sadd.s32 %s17, %s18
        %p214 = scmp.lt.s32.totalorder %s213, 1
        %s215 = scalar_select %p214, %s213, 1
        %s216 = smul.u32 62, %s215
        %s217 = ssub.s32 63, %s216
        %p218 = scmp.lt.s32.totalorder %s217, 62
        %s219 = scalar_select %p218, %s217, 62
        %s220 = smul.u32 128, %s219
        %p221 = scmp.lt.s32.totalorder %s216, 62
        %s222 = scalar_select %p221, %s216, 62
        %s223 = smul.addr %s222, 8
        %s224 = scalar_lea.vmem %s1, %s223
        %s225 = sadd.s32 %s17, %s18
        %p226 = scmp.lt.s32.totalorder %s225, 1
        %s227 = scalar_select %p226, %s225, 1
        %s228 = smul.u32 62, %s227
        %s229 = ssub.s32 63, %s228
        %p230 = scmp.lt.s32.totalorder %s229, 62
        %s231 = scalar_select %p230, %s229, 62
        %s232 = smul.u32 128, %s231
      $region28: #{masked_kl_div_loss.1} parent=19 // pred_fallthru
        _
      // Predicated region
      $region29: #{masked_kl_div_loss.1} parent=19 // pred_check
        %p233 = pneg %p112
      $region30: #{masked_kl_div_loss.1} parent=19 // pred_check_branch
        %235 = sbr.rel (%p233) target = $region32
      $region31: #{masked_kl_div_loss.1} parent=19 // pred_region
        %s236 = sadd.s32 %s17, %s18
        %p237 = scmp.lt.s32.totalorder %s236, 1
        %s238 = scalar_select %p237, %s236, 1
        %s239 = smul.u32 62, %s238
        %s240 = ssub.s32 63, %s239
        %p241 = scmp.lt.s32.totalorder %s240, 62
        %s242 = scalar_select %p241, %s240, 62
        %s243 = smul.u32 128, %s242
        %p244 = scmp.lt.s32.totalorder %s239, 62
        %s245 = scalar_select %p244, %s239, 62
        %s246 = smul.addr %s245, 8
        %s247 = scalar_lea.vmem %s2, %s246
        %s248 = sadd.s32 %s17, %s18
        %p249 = scmp.lt.s32.totalorder %s248, 1
        %s250 = scalar_select %p249, %s248, 1
        %s251 = smul.u32 62, %s250
        %s252 = ssub.s32 63, %s251
        %p253 = scmp.lt.s32.totalorder %s252, 62
        %s254 = scalar_select %p253, %s252, 62
        %s255 = smul.u32 128, %s254
      $region32: #{masked_kl_div_loss.1} parent=19 // pred_fallthru
        _
    $region20: #{masked_kl_div_loss.1} parent=5 // pred_fallthru
      _
    %p256 = scmp.le.s32.totalorder 1, %s10
    %p257 = scmp.lt.s32.totalorder %s10, 3
    %p258 = pnand %p256, %p257
    %p259 = pneg %p258
    // Predicated region
    $region33: #{masked_kl_div_loss.1} parent=5 // pred_check
      _
    $region34: #{masked_kl_div_loss.1} parent=5 // pred_check_branch
      %261 = sbr.rel (%p258) target = $region36
    $region35: #{masked_kl_div_loss.1} parent=5 // pred_region
      %s262 = ssub.s32 %s10, 1
      %s263 = sadd.s32 %s19, %s20
      %p264 = scmp.lt.s32.totalorder %s263, 1
      %s265 = scalar_select %p264, %s263, 1
      %s266 = smul.u32 62, %s265
      %s267 = ssub.s32 63, %s266
      %p268 = scmp.lt.s32.totalorder %s267, 62
      %s269 = scalar_select %p268, %s267, 62
      %s270 = smul.u32 128, %s269
      %p271 = scmp.lt.s32.totalorder %s266, 62
      %s272 = scalar_select %p271, %s266, 62
      %s273 = smul.addr %s272, 8
      %s274 = scalar_lea.vmem %s0, %s273
      %p275 = pneg %p54
      %p276 = pneg %p51
      %s277 = sadd.s32 %s19, %s20
      %p278 = scmp.lt.s32.totalorder %s277, 1
      %s279 = scalar_select %p278, %s277, 1
      %s280 = smul.u32 62, %s279
      %s281 = ssub.s32 63, %s280
      %p282 = scmp.lt.s32.totalorder %s281, 62
      %s283 = scalar_select %p282, %s281, 62
      %s284 = smul.u32 128, %s283
      %p285 = scmp.lt.s32.totalorder %s280, 62
      %s286 = scalar_select %p285, %s280, 62
      %s287 = smul.addr %s286, 8
      %s288 = scalar_lea.vmem %s1, %s287
      %p289 = pneg %p86
      %p290 = pneg %p83
      %s291 = sadd.s32 %s19, %s20
      %p292 = scmp.lt.s32.totalorder %s291, 1
      %s293 = scalar_select %p292, %s291, 1
      %s294 = smul.u32 62, %s293
      %s295 = ssub.s32 63, %s294
      %p296 = scmp.lt.s32.totalorder %s295, 62
      %s297 = scalar_select %p296, %s295, 62
      %s298 = smul.u32 128, %s297
      %p299 = scmp.lt.s32.totalorder %s294, 62
      %s300 = scalar_select %p299, %s294, 62
      %s301 = smul.addr %s300, 8
      %s302 = scalar_lea.vmem %s2, %s301
      %p303 = pneg %p118
      %p304 = pneg %p115
      %p305 = pneg %p139
      %p306 = pneg %p136
      %p307 = pneg %p165
      %p308 = pneg %p162
      %p309 = scmp.lt.s32.totalorder %s19, 1
      %s310 = scalar_select %p309, %s19, 1
      %s311 = smul.addr %s310, 8
      %s312 = scalar_lea.vmem %s4, %s311
      %s313 = sadd.s32 %s19, %s20
      %p314 = scmp.lt.s32.totalorder %s313, 1
      %s315 = scalar_select %p314, %s313, 1
      %s316 = smul.u32 62, %s315
      %s317 = ssub.s32 63, %s316
      %p318 = scmp.lt.s32.totalorder %s317, 62
      %s319 = scalar_select %p318, %s317, 62
      %s320 = smul.u32 128, %s319
      %p321 = scmp.lt.s32.totalorder %s316, 62
      %s322 = scalar_select %p321, %s316, 62
      %s323 = smul.addr %s322, 8
      %s324 = scalar_lea.vmem %s0, %s323
      %s325 = sadd.s32 %s19, %s20
      %p326 = scmp.lt.s32.totalorder %s325, 1
      %s327 = scalar_select %p326, %s325, 1
      %s328 = smul.u32 62, %s327
      %s329 = ssub.s32 63, %s328
      %p330 = scmp.lt.s32.totalorder %s329, 62
      %s331 = scalar_select %p330, %s329, 62
      %s332 = smul.u32 128, %s331
      %s333 = sadd.s32 %s19, %s20
      %p334 = scmp.lt.s32.totalorder %s333, 1
      %s335 = scalar_select %p334, %s333, 1
      %s336 = smul.u32 62, %s335
      %s337 = ssub.s32 63, %s336
      %p338 = scmp.lt.s32.totalorder %s337, 62
      %s339 = scalar_select %p338, %s337, 62
      %s340 = smul.u32 128, %s339
      %p341 = scmp.lt.s32.totalorder %s336, 62
      %s342 = scalar_select %p341, %s336, 62
      %s343 = smul.addr %s342, 8
      %s344 = scalar_lea.vmem %s1, %s343
      %s345 = sadd.s32 %s19, %s20
      %p346 = scmp.lt.s32.totalorder %s345, 1
      %s347 = scalar_select %p346, %s345, 1
      %s348 = smul.u32 62, %s347
      %s349 = ssub.s32 63, %s348
      %p350 = scmp.lt.s32.totalorder %s349, 62
      %s351 = scalar_select %p350, %s349, 62
      %s352 = smul.u32 128, %s351
      %s353 = sadd.s32 %s19, %s20
      %p354 = scmp.lt.s32.totalorder %s353, 1
      %s355 = scalar_select %p354, %s353, 1
      %s356 = smul.u32 62, %s355
      %s357 = ssub.s32 63, %s356
      %p358 = scmp.lt.s32.totalorder %s357, 62
      %s359 = scalar_select %p358, %s357, 62
      %s360 = smul.u32 128, %s359
      %p361 = scmp.lt.s32.totalorder %s356, 62
      %s362 = scalar_select %p361, %s356, 62
      %s363 = smul.addr %s362, 8
      %s364 = scalar_lea.vmem %s2, %s363
      %s365 = sadd.s32 %s19, %s20
      %p366 = scmp.lt.s32.totalorder %s365, 1
      %s367 = scalar_select %p366, %s365, 1
      %s368 = smul.u32 62, %s367
      %s369 = ssub.s32 63, %s368
      %p370 = scmp.lt.s32.totalorder %s369, 62
      %s371 = scalar_select %p370, %s369, 62
      %s372 = smul.u32 128, %s371
      %p373 = scmp.lt.s32.totalorder %s19, 1
      %s374 = scalar_select %p373, %s19, 1
      %s375 = smul.addr %s374, 8
      %s376 = scalar_lea.vmem %s4, %s375
      %p377 = scmp.eq.s32.totalorder %s20, 0
      // Predicated region
      $region37: #{masked_kl_div_loss.1} parent=35 // pred_check
        %p378 = pneg %p377
      $region38: #{masked_kl_div_loss.1} parent=35 // pred_check_branch
        %380 = sbr.rel (%p378) target = $region40
      $region39: #{masked_kl_div_loss.1} parent=35 // pred_region
        %381 = vst [vmem:[%s376] sm:$0xff] 0.0
      $region40: #{masked_kl_div_loss.1} parent=35 // pred_fallthru
        _
      %v382 = vld [vmem:[%s364] sm:$0xff]
      %v383 = vld [vmem:[%s364 + $0x8] sm:$0xff]
      %v384 = vld [vmem:[%s364 + $0x10] sm:$0xff]
      %v385 = vld [vmem:[%s364 + $0x18] sm:$0xff]
      %v386 = vld [vmem:[%s364 + $0x20] sm:$0xff]
      %v387 = vld [vmem:[%s364 + $0x28] sm:$0xff]
      %v388 = vld [vmem:[%s364 + $0x30] sm:$0xff]
      %v389 = vld [vmem:[%s364 + $0x38] sm:$0xff]
      %v390 = vld [vmem:[%s364 + $0x40] sm:$0xff]
      %v391 = vld [vmem:[%s364 + $0x48] sm:$0xff]
      %v392 = vld [vmem:[%s364 + $0x50] sm:$0xff]
      %v393 = vld [vmem:[%s364 + $0x58] sm:$0xff]
      %v394 = vld [vmem:[%s364 + $0x60] sm:$0xff]
      %v395 = vld [vmem:[%s364 + $0x68] sm:$0xff]
      %v396 = vld [vmem:[%s364 + $0x70] sm:$0xff]
      %v397 = vld [vmem:[%s364 + $0x78] sm:$0xff]
      %v398 = vld [vmem:[%s364 + $0x80] sm:$0xff]
      %v399 = vld [vmem:[%s364 + $0x88] sm:$0xff]
      %v400 = vld [vmem:[%s364 + $0x90] sm:$0xff]
      %v401 = vld [vmem:[%s364 + $0x98] sm:$0xff]
      %v402 = vld [vmem:[%s364 + $0xa0] sm:$0xff]
      %v403 = vld [vmem:[%s364 + $0xa8] sm:$0xff]
      %v404 = vld [vmem:[%s364 + $0xb0] sm:$0xff]
      %v405 = vld [vmem:[%s364 + $0xb8] sm:$0xff]
      %v406 = vld [vmem:[%s364 + $0xc0] sm:$0xff]
      %v407 = vld [vmem:[%s364 + $0xc8] sm:$0xff]
      %v408 = vld [vmem:[%s364 + $0xd0] sm:$0xff]
      %v409 = vld [vmem:[%s364 + $0xd8] sm:$0xff]
      %v410 = vld [vmem:[%s364 + $0xe0] sm:$0xff]
      %v411 = vld [vmem:[%s364 + $0xe8] sm:$0xff]
      %v412 = vld [vmem:[%s364 + $0xf0] sm:$0xff]
      %v413 = vld [vmem:[%s364 + $0xf8] sm:$0xff]
      %v414 = vld [vmem:[%s364 + $0x100] sm:$0xff]
      %v415 = vld [vmem:[%s364 + $0x108] sm:$0xff]
      %v416 = vld [vmem:[%s364 + $0x110] sm:$0xff]
      %v417 = vld [vmem:[%s364 + $0x118] sm:$0xff]
      %v418 = vld [vmem:[%s364 + $0x120] sm:$0xff]
      %v419 = vld [vmem:[%s364 + $0x128] sm:$0xff]
      %v420 = vld [vmem:[%s364 + $0x130] sm:$0xff]
      %v421 = vld [vmem:[%s364 + $0x138] sm:$0xff]
      %v422 = vld [vmem:[%s364 + $0x140] sm:$0xff]
      %v423 = vld [vmem:[%s364 + $0x148] sm:$0xff]
      %v424 = vld [vmem:[%s364 + $0x150] sm:$0xff]
      %v425 = vld [vmem:[%s364 + $0x158] sm:$0xff]
      %v426 = vld [vmem:[%s364 + $0x160] sm:$0xff]
      %v427 = vld [vmem:[%s364 + $0x168] sm:$0xff]
      %v428 = vld [vmem:[%s364 + $0x170] sm:$0xff]
      %v429 = vld [vmem:[%s364 + $0x178] sm:$0xff]
      %v430 = vld [vmem:[%s364 + $0x180] sm:$0xff]
      %v431 = vld [vmem:[%s364 + $0x188] sm:$0xff]
      %v432 = vld [vmem:[%s364 + $0x190] sm:$0xff]
      %v433 = vld [vmem:[%s364 + $0x198] sm:$0xff]
      %v434 = vld [vmem:[%s364 + $0x1a0] sm:$0xff]
      %v435 = vld [vmem:[%s364 + $0x1a8] sm:$0xff]
      %v436 = vld [vmem:[%s364 + $0x1b0] sm:$0xff]
      %v437 = vld [vmem:[%s364 + $0x1b8] sm:$0xff]
      %v438 = vld [vmem:[%s364 + $0x1c0] sm:$0xff]
      %v439 = vld [vmem:[%s364 + $0x1c8] sm:$0xff]
      %v440 = vld [vmem:[%s364 + $0x1d0] sm:$0xff]
      %v441 = vld [vmem:[%s364 + $0x1d8] sm:$0xff]
      %v442 = vld [vmem:[%s364 + $0x1e0] sm:$0xff]
      %v443 = vld [vmem:[%s364 + $0x1e8] sm:$0xff]
      %v444 = vld [vmem:[%s3] sm:$0xff]
      %vm445 = vcmask 64512
      %v447 = vsel %vm445, %v382, 0
      %v450 = vsel %vm445, %v383, 0
      %v453 = vsel %vm445, %v384, 0
      %v456 = vsel %vm445, %v385, 0
      %v459 = vsel %vm445, %v386, 0
      %v462 = vsel %vm445, %v387, 0
      %v465 = vsel %vm445, %v388, 0
      %v468 = vsel %vm445, %v389, 0
      %v471 = vsel %vm445, %v390, 0
      %v474 = vsel %vm445, %v391, 0
      %v477 = vsel %vm445, %v392, 0
      %v480 = vsel %vm445, %v393, 0
      %v483 = vsel %vm445, %v394, 0
      %v486 = vsel %vm445, %v395, 0
      %v489 = vsel %vm445, %v396, 0
      %v492 = vsel %vm445, %v397, 0
      %v495 = vsel %vm445, %v398, 0
      %v498 = vsel %vm445, %v399, 0
      %v501 = vsel %vm445, %v400, 0
      %v504 = vsel %vm445, %v401, 0
      %v507 = vsel %vm445, %v402, 0
      %v510 = vsel %vm445, %v403, 0
      %v513 = vsel %vm445, %v404, 0
      %v516 = vsel %vm445, %v405, 0
      %v519 = vsel %vm445, %v406, 0
      %v522 = vsel %vm445, %v407, 0
      %v525 = vsel %vm445, %v408, 0
      %v528 = vsel %vm445, %v409, 0
      %v531 = vsel %vm445, %v410, 0
      %v534 = vsel %vm445, %v411, 0
      %v537 = vsel %vm445, %v412, 0
      %v540 = vsel %vm445, %v413, 0
      %v543 = vsel %vm445, %v414, 0
      %v546 = vsel %vm445, %v415, 0
      %v549 = vsel %vm445, %v416, 0
      %v552 = vsel %vm445, %v417, 0
      %v555 = vsel %vm445, %v418, 0
      %v558 = vsel %vm445, %v419, 0
      %v561 = vsel %vm445, %v420, 0
      %v564 = vsel %vm445, %v421, 0
      %v567 = vsel %vm445, %v422, 0
      %v570 = vsel %vm445, %v423, 0
      %v573 = vsel %vm445, %v424, 0
      %v576 = vsel %vm445, %v425, 0
      %v579 = vsel %vm445, %v426, 0
      %v582 = vsel %vm445, %v427, 0
      %v585 = vsel %vm445, %v428, 0
      %v588 = vsel %vm445, %v429, 0
      %v591 = vsel %vm445, %v430, 0
      %v594 = vsel %vm445, %v431, 0
      %v597 = vsel %vm445, %v432, 0
      %v600 = vsel %vm445, %v433, 0
      %v603 = vsel %vm445, %v434, 0
      %v606 = vsel %vm445, %v435, 0
      %v609 = vsel %vm445, %v436, 0
      %v612 = vsel %vm445, %v437, 0
      %v615 = vsel %vm445, %v438, 0
      %v618 = vsel %vm445, %v439, 0
      %v621 = vsel %vm445, %v440, 0
      %v624 = vsel %vm445, %v441, 0
      %v627 = vsel %vm445, %v442, 0
      %v630 = vsel %vm445, %v443, 0
      %632 = vmatprep.subr.mxu0 0.0
      %633 = vmatpush1.msra.mxu0 %v444
      %634 = vmatprep.subr.mxu0 0.0
      %635 = vmatpush1.msra.mxu0 0.0
      %636 = vmatprep.subr.mxu0 0.0
      %637 = vmatpush1.msra.mxu0 0.0
      %638 = vmatprep.subr.mxu0 0.0
      %639 = vmatpush1.msra.mxu0 0.0
      %640 = vmatprep.subr.mxu0 0.0
      %641 = vmatpush1.msra.mxu0 0.0
      %642 = vmatprep.subr.mxu0 0.0
      %643 = vmatpush1.msra.mxu0 0.0
      %644 = vmatprep.subr.mxu0 0.0
      %645 = vmatpush1.msra.mxu0 0.0
      %646 = vmatprep.subr.mxu0 0.0
      %647 = vmatpush1.msra.mxu0 0.0
      %648 = vmatprep.subr.mxu0 0.0
      %649 = vmatpush1.msra.mxu0 0.0
      %650 = vmatprep.subr.mxu0 0.0
      %651 = vmatpush1.msra.mxu0 0.0
      %652 = vmatprep.subr.mxu0 0.0
      %653 = vmatpush1.msra.mxu0 0.0
      %654 = vmatprep.subr.mxu0 0.0
      %655 = vmatpush1.msra.mxu0 0.0
      %656 = vmatprep.subr.mxu0 0.0
      %657 = vmatpush1.msra.mxu0 0.0
      %658 = vmatprep.subr.mxu0 0.0
      %659 = vmatpush1.msra.mxu0 0.0
      %660 = vmatprep.subr.mxu0 0.0
      %661 = vmatpush1.msra.mxu0 0.0
      %662 = vmatprep.subr.mxu0 0.0
      %663 = vmatpush1.msra.mxu0 0.0
      %664 = vmatprep.subr.mxu0 0.0
      %665 = vmatpush1.msra.mxu0 0.0
      %666 = vmatprep.subr.mxu0 0.0
      %667 = vmatpush1.msra.mxu0 0.0
      %668 = vmatprep.subr.mxu0 0.0
      %669 = vmatpush1.msra.mxu0 0.0
      %670 = vmatprep.subr.mxu0 0.0
      %671 = vmatpush1.msra.mxu0 0.0
      %672 = vmatprep.subr.mxu0 0.0
      %673 = vmatpush1.msra.mxu0 0.0
      %674 = vmatprep.subr.mxu0 0.0
      %675 = vmatpush1.msra.mxu0 0.0
      %676 = vmatprep.subr.mxu0 0.0
      %677 = vmatpush1.msra.mxu0 0.0
      %678 = vmatprep.subr.mxu0 0.0
      %679 = vmatpush1.msra.mxu0 0.0
      %680 = vmatprep.subr.mxu0 0.0
      %681 = vmatpush1.msra.mxu0 0.0
      %682 = vmatprep.subr.mxu0 0.0
      %683 = vmatpush1.msra.mxu0 0.0
      %684 = vmatprep.subr.mxu0 0.0
      %685 = vmatpush1.msra.mxu0 0.0
      %686 = vmatprep.subr.mxu0 0.0
      %687 = vmatpush1.msra.mxu0 0.0
      %688 = vmatprep.subr.mxu0 0.0
      %689 = vmatpush1.msra.mxu0 0.0
      %690 = vmatprep.subr.mxu0 0.0
      %691 = vmatpush1.msra.mxu0 0.0
      %692 = vmatprep.subr.mxu0 0.0
      %693 = vmatpush1.msra.mxu0 0.0
      %694 = vmatprep.subr.mxu0 0.0
      %695 = vmatpush1.msra.mxu0 0.0
      %696 = vmatprep.mubr.f32.mxu0 0.0
      %697 = vmatmul.mubr.f32.gmra.mrb[0].mxu0 %v447
      %v698 = vpop.f32.mrb[0].mxu0
      %v699 = vadd.f32 0.0, %v698
      %v700 = vpop.f32.mrb[0].mxu0
      %701 = vmatprep.mubr.f32.mxu0 0.0
      %702 = vmatmul.mubr.f32.gmra.mrb[0].mxu0 %v450
      %v703 = vpop.f32.mrb[0].mxu0
      %v704 = vadd.f32 0.0, %v703
      %v705 = vpop.f32.mrb[0].mxu0
      %706 = vmatprep.mubr.f32.mxu0 0.0
      %707 = vmatmul.mubr.f32.gmra.mrb[0].mxu0 %v453
      %v708 = vpop.f32.mrb[0].mxu0
      %v709 = vadd.f32 0.0, %v708
      %v710 = vpop.f32.mrb[0].mxu0
      %711 = vmatprep.mubr.f32.mxu0 0.0
      %712 = vmatmul.mubr.f32.gmra.mrb[0].mxu0 %v456
      %v713 = vpop.f32.mrb[0].mxu0
      %v714 = vadd.f32 0.0, %v713
      %v715 = vpop.f32.mrb[0].mxu0
      %716 = vmatprep.mubr.f32.mxu0 0.0
      %717 = vmatmul.mubr.f32.gmra.mrb[0].mxu0 %v459
      %v718 = vpop.f32.mrb[0].mxu0
      %v719 = vadd.f32 0.0, %v718
      %v720 = vpop.f32.mrb[0].mxu0
      %721 = vmatprep.mubr.f32.mxu0 0.0
      %722 = vmatmul.mubr.f32.gmra.mrb[0].mxu0 %v462
      %v723 = vpop.f32.mrb[0].mxu0
      %v724 = vadd.f32 0.0, %v723
      %v725 = vpop.f32.mrb[0].mxu0
      %726 = vmatprep.mubr.f32.mxu0 0.0
      %727 = vmatmul.mubr.f32.gmra.mrb[0].mxu0 %v465
      %v728 = vpop.f32.mrb[0].mxu0
      %v729 = vadd.f32 0.0, %v728
      %v730 = vpop.f32.mrb[0].mxu0
      %731 = vmatprep.mubr.f32.mxu0 0.0
      %732 = vmatmul.mubr.f32.gmra.mrb[0].mxu0 %v468
      %v733 = vpop.f32.mrb[0].mxu0
      %v734 = vadd.f32 0.0, %v733
      %v735 = vpop.f32.mrb[0].mxu0
      %736 = vmatprep.mubr.f32.mxu0 0.0
      %737 = vmatmul.mubr.f32.gmra.mrb[0].mxu0 %v471
      %v738 = vpop.f32.mrb[0].mxu0
      %v739 = vadd.f32 0.0, %v738
      %v740 = vpop.f32.mrb[0].mxu0
      %741 = vmatprep.mubr.f32.mxu0 0.0
      %742 = vmatmul.mubr.f32.gmra.mrb[0].mxu0 %v474
      %v743 = vpop.f32.mrb[0].mxu0
      %v744 = vadd.f32 0.0, %v743
      %v745 = vpop.f32.mrb[0].mxu0
      %746 = vmatprep.mubr.f32.mxu0 0.0
      %747 = vmatmul.mubr.f32.gmra.mrb[0].mxu0 %v477
      %v748 = vpop.f32.mrb[0].mxu0
      %v749 = vadd.f32 0.0, %v748
      %v750 = vpop.f32.mrb[0].mxu0
      %751 = vmatprep.mubr.f32.mxu0 0.0
      %752 = vmatmul.mubr.f32.gmra.mrb[0].mxu0 %v480
      %v753 = vpop.f32.mrb[0].mxu0
      %v754 = vadd.f32 0.0, %v753
      %v755 = vpop.f32.mrb[0].mxu0
      %756 = vmatprep.mubr.f32.mxu0 0.0
      %757 = vmatmul.mubr.f32.gmra.mrb[0].mxu0 %v483
      %v758 = vpop.f32.mrb[0].mxu0
      %v759 = vadd.f32 0.0, %v758
      %v760 = vpop.f32.mrb[0].mxu0
      %761 = vmatprep.mubr.f32.mxu0 0.0
      %762 = vmatmul.mubr.f32.gmra.mrb[0].mxu0 %v486
      %v763 = vpop.f32.mrb[0].mxu0
      %v764 = vadd.f32 0.0, %v763
      %v765 = vpop.f32.mrb[0].mxu0
      %766 = vmatprep.mubr.f32.mxu0 0.0
      %767 = vmatmul.mubr.f32.gmra.mrb[0].mxu0 %v489
      %v768 = vpop.f32.mrb[0].mxu0
      %v769 = vadd.f32 0.0, %v768
      %v770 = vpop.f32.mrb[0].mxu0
      %771 = vmatprep.mubr.f32.mxu0 0.0
      %772 = vmatmul.mubr.f32.gmra.mrb[0].mxu0 %v492
      %v773 = vpop.f32.mrb[0].mxu0
      %v774 = vadd.f32 0.0, %v773
      %v775 = vpop.f32.mrb[0].mxu0
      %776 = vmatprep.mubr.f32.mxu0 0.0
      %777 = vmatmul.mubr.f32.gmra.mrb[0].mxu0 %v495
      %v778 = vpop.f32.mrb[0].mxu0
      %v779 = vadd.f32 0.0, %v778
      %v780 = vpop.f32.mrb[0].mxu0
      %781 = vmatprep.mubr.f32.mxu0 0.0
      %782 = vmatmul.mubr.f32.gmra.mrb[0].mxu0 %v498
      %v783 = vpop.f32.mrb[0].mxu0
      %v784 = vadd.f32 0.0, %v783
      %v785 = vpop.f32.mrb[0].mxu0
      %786 = vmatprep.mubr.f32.mxu0 0.0
      %787 = vmatmul.mubr.f32.gmra.mrb[0].mxu0 %v501
      %v788 = vpop.f32.mrb[0].mxu0
      %v789 = vadd.f32 0.0, %v788
      %v790 = vpop.f32.mrb[0].mxu0
      %791 = vmatprep.mubr.f32.mxu0 0.0
      %792 = vmatmul.mubr.f32.gmra.mrb[0].mxu0 %v504
      %v793 = vpop.f32.mrb[0].mxu0
      %v794 = vadd.f32 0.0, %v793
      %v795 = vpop.f32.mrb[0].mxu0
      %796 = vmatprep.mubr.f32.mxu0 0.0
      %797 = vmatmul.mubr.f32.gmra.mrb[0].mxu0 %v507
      %v798 = vpop.f32.mrb[0].mxu0
      %v799 = vadd.f32 0.0, %v798
      %v800 = vpop.f32.mrb[0].mxu0
      %801 = vmatprep.mubr.f32.mxu0 0.0
      %802 = vmatmul.mubr.f32.gmra.mrb[0].mxu0 %v510
      %v803 = vpop.f32.mrb[0].mxu0
      %v804 = vadd.f32 0.0, %v803
      %v805 = vpop.f32.mrb[0].mxu0
      %806 = vmatprep.mubr.f32.mxu0 0.0
      %807 = vmatmul.mubr.f32.gmra.mrb[0].mxu0 %v513
      %v808 = vpop.f32.mrb[0].mxu0
      %v809 = vadd.f32 0.0, %v808
      %v810 = vpop.f32.mrb[0].mxu0
      %811 = vmatprep.mubr.f32.mxu0 0.0
      %812 = vmatmul.mubr.f32.gmra.mrb[0].mxu0 %v516
      %v813 = vpop.f32.mrb[0].mxu0
      %v814 = vadd.f32 0.0, %v813
      %v815 = vpop.f32.mrb[0].mxu0
      %816 = vmatprep.mubr.f32.mxu0 0.0
      %817 = vmatmul.mubr.f32.gmra.mrb[0].mxu0 %v519
      %v818 = vpop.f32.mrb[0].mxu0
      %v819 = vadd.f32 0.0, %v818
      %v820 = vpop.f32.mrb[0].mxu0
      %821 = vmatprep.mubr.f32.mxu0 0.0
      %822 = vmatmul.mubr.f32.gmra.mrb[0].mxu0 %v522
      %v823 = vpop.f32.mrb[0].mxu0
      %v824 = vadd.f32 0.0, %v823
      %v825 = vpop.f32.mrb[0].mxu0
      %826 = vmatprep.mubr.f32.mxu0 0.0
      %827 = vmatmul.mubr.f32.gmra.mrb[0].mxu0 %v525
      %v828 = vpop.f32.mrb[0].mxu0
      %v829 = vadd.f32 0.0, %v828
      %v830 = vpop.f32.mrb[0].mxu0
      %831 = vmatprep.mubr.f32.mxu0 0.0
      %832 = vmatmul.mubr.f32.gmra.mrb[0].mxu0 %v528
      %v833 = vpop.f32.mrb[0].mxu0
      %v834 = vadd.f32 0.0, %v833
      %v835 = vpop.f32.mrb[0].mxu0
      %836 = vmatprep.mubr.f32.mxu0 0.0
      %837 = vmatmul.mubr.f32.gmra.mrb[0].mxu0 %v531
      %v838 = vpop.f32.mrb[0].mxu0
      %v839 = vadd.f32 0.0, %v838
      %v840 = vpop.f32.mrb[0].mxu0
      %841 = vmatprep.mubr.f32.mxu0 0.0
      %842 = vmatmul.mubr.f32.gmra.mrb[0].mxu0 %v534
      %v843 = vpop.f32.mrb[0].mxu0
      %v844 = vadd.f32 0.0, %v843
      %v845 = vpop.f32.mrb[0].mxu0
      %846 = vmatprep.mubr.f32.mxu0 0.0
      %847 = vmatmul.mubr.f32.gmra.mrb[0].mxu0 %v537
      %v848 = vpop.f32.mrb[0].mxu0
      %v849 = vadd.f32 0.0, %v848
      %v850 = vpop.f32.mrb[0].mxu0
      %851 = vmatprep.mubr.f32.mxu0 0.0
      %852 = vmatmul.mubr.f32.gmra.mrb[0].mxu0 %v540
      %v853 = vpop.f32.mrb[0].mxu0
      %v854 = vadd.f32 0.0, %v853
      %v855 = vpop.f32.mrb[0].mxu0
      %856 = vmatprep.mubr.f32.mxu0 0.0
      %857 = vmatmul.mubr.f32.gmra.mrb[0].mxu0 %v543
      %v858 = vpop.f32.mrb[0].mxu0
      %v859 = vadd.f32 0.0, %v858
      %v860 = vpop.f32.mrb[0].mxu0
      %861 = vmatprep.mubr.f32.mxu0 0.0
      %862 = vmatmul.mubr.f32.gmra.mrb[0].mxu0 %v546
      %v863 = vpop.f32.mrb[0].mxu0
      %v864 = vadd.f32 0.0, %v863
      %v865 = vpop.f32.mrb[0].mxu0
      %866 = vmatprep.mubr.f32.mxu0 0.0
      %867 = vmatmul.mubr.f32.gmra.mrb[0].mxu0 %v549
      %v868 = vpop.f32.mrb[0].mxu0
      %v869 = vadd.f32 0.0, %v868
      %v870 = vpop.f32.mrb[0].mxu0
      %871 = vmatprep.mubr.f32.mxu0 0.0
      %872 = vmatmul.mubr.f32.gmra.mrb[0].mxu0 %v552
      %v873 = vpop.f32.mrb[0].mxu0
      %v874 = vadd.f32 0.0, %v873
      %v875 = vpop.f32.mrb[0].mxu0
      %876 = vmatprep.mubr.f32.mxu0 0.0
      %877 = vmatmul.mubr.f32.gmra.mrb[0].mxu0 %v555
      %v878 = vpop.f32.mrb[0].mxu0
      %v879 = vadd.f32 0.0, %v878
      %v880 = vpop.f32.mrb[0].mxu0
      %881 = vmatprep.mubr.f32.mxu0 0.0
      %882 = vmatmul.mubr.f32.gmra.mrb[0].mxu0 %v558
      %v883 = vpop.f32.mrb[0].mxu0
      %v884 = vadd.f32 0.0, %v883
      %v885 = vpop.f32.mrb[0].mxu0
      %886 = vmatprep.mubr.f32.mxu0 0.0
      %887 = vmatmul.mubr.f32.gmra.mrb[0].mxu0 %v561
      %v888 = vpop.f32.mrb[0].mxu0
      %v889 = vadd.f32 0.0, %v888
      %v890 = vpop.f32.mrb[0].mxu0
      %891 = vmatprep.mubr.f32.mxu0 0.0
      %892 = vmatmul.mubr.f32.gmra.mrb[0].mxu0 %v564
      %v893 = vpop.f32.mrb[0].mxu0
      %v894 = vadd.f32 0.0, %v893
      %v895 = vpop.f32.mrb[0].mxu0
      %896 = vmatprep.mubr.f32.mxu0 0.0
      %897 = vmatmul.mubr.f32.gmra.mrb[0].mxu0 %v567
      %v898 = vpop.f32.mrb[0].mxu0
      %v899 = vadd.f32 0.0, %v898
      %v900 = vpop.f32.mrb[0].mxu0
      %901 = vmatprep.mubr.f32.mxu0 0.0
      %902 = vmatmul.mubr.f32.gmra.mrb[0].mxu0 %v570
      %v903 = vpop.f32.mrb[0].mxu0
      %v904 = vadd.f32 0.0, %v903
      %v905 = vpop.f32.mrb[0].mxu0
      %906 = vmatprep.mubr.f32.mxu0 0.0
      %907 = vmatmul.mubr.f32.gmra.mrb[0].mxu0 %v573
      %v908 = vpop.f32.mrb[0].mxu0
      %v909 = vadd.f32 0.0, %v908
      %v910 = vpop.f32.mrb[0].mxu0
      %911 = vmatprep.mubr.f32.mxu0 0.0
      %912 = vmatmul.mubr.f32.gmra.mrb[0].mxu0 %v576
      %v913 = vpop.f32.mrb[0].mxu0
      %v914 = vadd.f32 0.0, %v913
      %v915 = vpop.f32.mrb[0].mxu0
      %916 = vmatprep.mubr.f32.mxu0 0.0
      %917 = vmatmul.mubr.f32.gmra.mrb[0].mxu0 %v579
      %v918 = vpop.f32.mrb[0].mxu0
      %v919 = vadd.f32 0.0, %v918
      %v920 = vpop.f32.mrb[0].mxu0
      %921 = vmatprep.mubr.f32.mxu0 0.0
      %922 = vmatmul.mubr.f32.gmra.mrb[0].mxu0 %v582
      %v923 = vpop.f32.mrb[0].mxu0
      %v924 = vadd.f32 0.0, %v923
      %v925 = vpop.f32.mrb[0].mxu0
      %926 = vmatprep.mubr.f32.mxu0 0.0
      %927 = vmatmul.mubr.f32.gmra.mrb[0].mxu0 %v585
      %v928 = vpop.f32.mrb[0].mxu0
      %v929 = vadd.f32 0.0, %v928
      %v930 = vpop.f32.mrb[0].mxu0
      %931 = vmatprep.mubr.f32.mxu0 0.0
      %932 = vmatmul.mubr.f32.gmra.mrb[0].mxu0 %v588
      %v933 = vpop.f32.mrb[0].mxu0
      %v934 = vadd.f32 0.0, %v933
      %v935 = vpop.f32.mrb[0].mxu0
      %936 = vmatprep.mubr.f32.mxu0 0.0
      %937 = vmatmul.mubr.f32.gmra.mrb[0].mxu0 %v591
      %v938 = vpop.f32.mrb[0].mxu0
      %v939 = vadd.f32 0.0, %v938
      %v940 = vpop.f32.mrb[0].mxu0
      %941 = vmatprep.mubr.f32.mxu0 0.0
      %942 = vmatmul.mubr.f32.gmra.mrb[0].mxu0 %v594
      %v943 = vpop.f32.mrb[0].mxu0
      %v944 = vadd.f32 0.0, %v943
      %v945 = vpop.f32.mrb[0].mxu0
      %946 = vmatprep.mubr.f32.mxu0 0.0
      %947 = vmatmul.mubr.f32.gmra.mrb[0].mxu0 %v597
      %v948 = vpop.f32.mrb[0].mxu0
      %v949 = vadd.f32 0.0, %v948
      %v950 = vpop.f32.mrb[0].mxu0
      %951 = vmatprep.mubr.f32.mxu0 0.0
      %952 = vmatmul.mubr.f32.gmra.mrb[0].mxu0 %v600
      %v953 = vpop.f32.mrb[0].mxu0
      %v954 = vadd.f32 0.0, %v953
      %v955 = vpop.f32.mrb[0].mxu0
      %956 = vmatprep.mubr.f32.mxu0 0.0
      %957 = vmatmul.mubr.f32.gmra.mrb[0].mxu0 %v603
      %v958 = vpop.f32.mrb[0].mxu0
      %v959 = vadd.f32 0.0, %v958
      %v960 = vpop.f32.mrb[0].mxu0
      %961 = vmatprep.mubr.f32.mxu0 0.0
      %962 = vmatmul.mubr.f32.gmra.mrb[0].mxu0 %v606
      %v963 = vpop.f32.mrb[0].mxu0
      %v964 = vadd.f32 0.0, %v963
      %v965 = vpop.f32.mrb[0].mxu0
      %966 = vmatprep.mubr.f32.mxu0 0.0
      %967 = vmatmul.mubr.f32.gmra.mrb[0].mxu0 %v609
      %v968 = vpop.f32.mrb[0].mxu0
      %v969 = vadd.f32 0.0, %v968
      %v970 = vpop.f32.mrb[0].mxu0
      %971 = vmatprep.mubr.f32.mxu0 0.0
      %972 = vmatmul.mubr.f32.gmra.mrb[0].mxu0 %v612
      %v973 = vpop.f32.mrb[0].mxu0
      %v974 = vadd.f32 0.0, %v973
      %v975 = vpop.f32.mrb[0].mxu0
      %976 = vmatprep.mubr.f32.mxu0 0.0
      %977 = vmatmul.mubr.f32.gmra.mrb[0].mxu0 %v615
      %v978 = vpop.f32.mrb[0].mxu0
      %v979 = vadd.f32 0.0, %v978
      %v980 = vpop.f32.mrb[0].mxu0
      %981 = vmatprep.mubr.f32.mxu0 0.0
      %982 = vmatmul.mubr.f32.gmra.mrb[0].mxu0 %v618
      %v983 = vpop.f32.mrb[0].mxu0
      %v984 = vadd.f32 0.0, %v983
      %v985 = vpop.f32.mrb[0].mxu0
      %986 = vmatprep.mubr.f32.mxu0 0.0
      %987 = vmatmul.mubr.f32.gmra.mrb[0].mxu0 %v621
      %v988 = vpop.f32.mrb[0].mxu0
      %v989 = vadd.f32 0.0, %v988
      %v990 = vpop.f32.mrb[0].mxu0
      %991 = vmatprep.mubr.f32.mxu0 0.0
      %992 = vmatmul.mubr.f32.gmra.mrb[0].mxu0 %v624
      %v993 = vpop.f32.mrb[0].mxu0
      %v994 = vadd.f32 0.0, %v993
      %v995 = vpop.f32.mrb[0].mxu0
      %996 = vmatprep.mubr.f32.mxu0 0.0
      %997 = vmatmul.mubr.f32.gmra.mrb[0].mxu0 %v627
      %v998 = vpop.f32.mrb[0].mxu0
      %v999 = vadd.f32 0.0, %v998
      %v1000 = vpop.f32.mrb[0].mxu0
      %1001 = vmatprep.mubr.f32.mxu0 0.0
      %1002 = vmatmul.mubr.f32.gmra.mrb[0].mxu0 %v630
      %v1003 = vpop.f32.mrb[0].mxu0
      %v1004 = vadd.f32 0.0, %v1003
      %v1005 = vpop.f32.mrb[0].mxu0
      %1006 = vdwg.mxu0
      %v1007 = vld [vmem:[%s324] sm:$0xff]
      %v1008 = vld [vmem:[%s324 + $0x8] sm:$0xff]
      %v1009 = vld [vmem:[%s324 + $0x10] sm:$0xff]
      %v1010 = vld [vmem:[%s324 + $0x18] sm:$0xff]
      %v1011 = vld [vmem:[%s324 + $0x20] sm:$0xff]
      %v1012 = vld [vmem:[%s324 + $0x28] sm:$0xff]
      %v1013 = vld [vmem:[%s324 + $0x30] sm:$0xff]
      %v1014 = vld [vmem:[%s324 + $0x38] sm:$0xff]
      %v1015 = vld [vmem:[%s324 + $0x40] sm:$0xff]
      %v1016 = vld [vmem:[%s324 + $0x48] sm:$0xff]
      %v1017 = vld [vmem:[%s324 + $0x50] sm:$0xff]
      %v1018 = vld [vmem:[%s324 + $0x58] sm:$0xff]
      %v1019 = vld [vmem:[%s324 + $0x60] sm:$0xff]
      %v1020 = vld [vmem:[%s324 + $0x68] sm:$0xff]
      %v1021 = vld [vmem:[%s324 + $0x70] sm:$0xff]
      %v1022 = vld [vmem:[%s324 + $0x78] sm:$0xff]
      %v1023 = vld [vmem:[%s324 + $0x80] sm:$0xff]
      %v1024 = vld [vmem:[%s324 + $0x88] sm:$0xff]
      %v1025 = vld [vmem:[%s324 + $0x90] sm:$0xff]
      %v1026 = vld [vmem:[%s324 + $0x98] sm:$0xff]
      %v1027 = vld [vmem:[%s324 + $0xa0] sm:$0xff]
      %v1028 = vld [vmem:[%s324 + $0xa8] sm:$0xff]
      %v1029 = vld [vmem:[%s324 + $0xb0] sm:$0xff]
      %v1030 = vld [vmem:[%s324 + $0xb8] sm:$0xff]
      %v1031 = vld [vmem:[%s324 + $0xc0] sm:$0xff]
      %v1032 = vld [vmem:[%s324 + $0xc8] sm:$0xff]
      %v1033 = vld [vmem:[%s324 + $0xd0] sm:$0xff]
      %v1034 = vld [vmem:[%s324 + $0xd8] sm:$0xff]
      %v1035 = vld [vmem:[%s324 + $0xe0] sm:$0xff]
      %v1036 = vld [vmem:[%s324 + $0xe8] sm:$0xff]
      %v1037 = vld [vmem:[%s324 + $0xf0] sm:$0xff]
      %v1038 = vld [vmem:[%s324 + $0xf8] sm:$0xff]
      %v1039 = vld [vmem:[%s324 + $0x100] sm:$0xff]
      %v1040 = vld [vmem:[%s324 + $0x108] sm:$0xff]
      %v1041 = vld [vmem:[%s324 + $0x110] sm:$0xff]
      %v1042 = vld [vmem:[%s324 + $0x118] sm:$0xff]
      %v1043 = vld [vmem:[%s324 + $0x120] sm:$0xff]
      %v1044 = vld [vmem:[%s324 + $0x128] sm:$0xff]
      %v1045 = vld [vmem:[%s324 + $0x130] sm:$0xff]
      %v1046 = vld [vmem:[%s324 + $0x138] sm:$0xff]
      %v1047 = vld [vmem:[%s324 + $0x140] sm:$0xff]
      %v1048 = vld [vmem:[%s324 + $0x148] sm:$0xff]
      %v1049 = vld [vmem:[%s324 + $0x150] sm:$0xff]
      %v1050 = vld [vmem:[%s324 + $0x158] sm:$0xff]
      %v1051 = vld [vmem:[%s324 + $0x160] sm:$0xff]
      %v1052 = vld [vmem:[%s324 + $0x168] sm:$0xff]
      %v1053 = vld [vmem:[%s324 + $0x170] sm:$0xff]
      %v1054 = vld [vmem:[%s324 + $0x178] sm:$0xff]
      %v1055 = vld [vmem:[%s324 + $0x180] sm:$0xff]
      %v1056 = vld [vmem:[%s324 + $0x188] sm:$0xff]
      %v1057 = vld [vmem:[%s324 + $0x190] sm:$0xff]
      %v1058 = vld [vmem:[%s324 + $0x198] sm:$0xff]
      %v1059 = vld [vmem:[%s324 + $0x1a0] sm:$0xff]
      %v1060 = vld [vmem:[%s324 + $0x1a8] sm:$0xff]
      %v1061 = vld [vmem:[%s324 + $0x1b0] sm:$0xff]
      %v1062 = vld [vmem:[%s324 + $0x1b8] sm:$0xff]
      %v1063 = vld [vmem:[%s324 + $0x1c0] sm:$0xff]
      %v1064 = vld [vmem:[%s324 + $0x1c8] sm:$0xff]
      %v1065 = vld [vmem:[%s324 + $0x1d0] sm:$0xff]
      %v1066 = vld [vmem:[%s324 + $0x1d8] sm:$0xff]
      %v1067 = vld [vmem:[%s324 + $0x1e0] sm:$0xff]
      %v1068 = vld [vmem:[%s324 + $0x1e8] sm:$0xff]
      %v1069 = vmul.f32 %v1007, %v699
      %v1070 = vmul.f32 %v1008, %v704
      %v1071 = vmul.f32 %v1009, %v709
      %v1072 = vmul.f32 %v1010, %v714
      %v1073 = vmul.f32 %v1011, %v719
      %v1074 = vmul.f32 %v1012, %v724
      %v1075 = vmul.f32 %v1013, %v729
      %v1076 = vmul.f32 %v1014, %v734
      %v1077 = vmul.f32 %v1015, %v739
      %v1078 = vmul.f32 %v1016, %v744
      %v1079 = vmul.f32 %v1017, %v749
      %v1080 = vmul.f32 %v1018, %v754
      %v1081 = vmul.f32 %v1019, %v759
      %v1082 = vmul.f32 %v1020, %v764
      %v1083 = vmul.f32 %v1021, %v769
      %v1084 = vmul.f32 %v1022, %v774
      %v1085 = vmul.f32 %v1023, %v779
      %v1086 = vmul.f32 %v1024, %v784
      %v1087 = vmul.f32 %v1025, %v789
      %v1088 = vmul.f32 %v1026, %v794
      %v1089 = vmul.f32 %v1027, %v799
      %v1090 = vmul.f32 %v1028, %v804
      %v1091 = vmul.f32 %v1029, %v809
      %v1092 = vmul.f32 %v1030, %v814
      %v1093 = vmul.f32 %v1031, %v819
      %v1094 = vmul.f32 %v1032, %v824
      %v1095 = vmul.f32 %v1033, %v829
      %v1096 = vmul.f32 %v1034, %v834
      %v1097 = vmul.f32 %v1035, %v839
      %v1098 = vmul.f32 %v1036, %v844
      %v1099 = vmul.f32 %v1037, %v849
      %v1100 = vmul.f32 %v1038, %v854
      %v1101 = vmul.f32 %v1039, %v859
      %v1102 = vmul.f32 %v1040, %v864
      %v1103 = vmul.f32 %v1041, %v869
      %v1104 = vmul.f32 %v1042, %v874
      %v1105 = vmul.f32 %v1043, %v879
      %v1106 = vmul.f32 %v1044, %v884
      %v1107 = vmul.f32 %v1045, %v889
      %v1108 = vmul.f32 %v1046, %v894
      %v1109 = vmul.f32 %v1047, %v899
      %v1110 = vmul.f32 %v1048, %v904
      %v1111 = vmul.f32 %v1049, %v909
      %v1112 = vmul.f32 %v1050, %v914
      %v1113 = vmul.f32 %v1051, %v919
      %v1114 = vmul.f32 %v1052, %v924
      %v1115 = vmul.f32 %v1053, %v929
      %v1116 = vmul.f32 %v1054, %v934
      %v1117 = vmul.f32 %v1055, %v939
      %v1118 = vmul.f32 %v1056, %v944
      %v1119 = vmul.f32 %v1057, %v949
      %v1120 = vmul.f32 %v1058, %v954
      %v1121 = vmul.f32 %v1059, %v959
      %v1122 = vmul.f32 %v1060, %v964
      %v1123 = vmul.f32 %v1061, %v969
      %v1124 = vmul.f32 %v1062, %v974
      %v1125 = vmul.f32 %v1063, %v979
      %v1126 = vmul.f32 %v1064, %v984
      %v1127 = vmul.f32 %v1065, %v989
      %v1128 = vmul.f32 %v1066, %v994
      %v1129 = vmul.f32 %v1067, %v999
      %v1130 = vmul.f32 %v1068, %v1004
      %v1131 = vld [vmem:[%s344] sm:$0xff]
      %v1132 = vld [vmem:[%s344 + $0x8] sm:$0xff]
      %v1133 = vld [vmem:[%s344 + $0x10] sm:$0xff]
      %v1134 = vld [vmem:[%s344 + $0x18] sm:$0xff]
      %v1135 = vld [vmem:[%s344 + $0x20] sm:$0xff]
      %v1136 = vld [vmem:[%s344 + $0x28] sm:$0xff]
      %v1137 = vld [vmem:[%s344 + $0x30] sm:$0xff]
      %v1138 = vld [vmem:[%s344 + $0x38] sm:$0xff]
      %v1139 = vld [vmem:[%s344 + $0x40] sm:$0xff]
      %v1140 = vld [vmem:[%s344 + $0x48] sm:$0xff]
      %v1141 = vld [vmem:[%s344 + $0x50] sm:$0xff]
      %v1142 = vld [vmem:[%s344 + $0x58] sm:$0xff]
      %v1143 = vld [vmem:[%s344 + $0x60] sm:$0xff]
      %v1144 = vld [vmem:[%s344 + $0x68] sm:$0xff]
      %v1145 = vld [vmem:[%s344 + $0x70] sm:$0xff]
      %v1146 = vld [vmem:[%s344 + $0x78] sm:$0xff]
      %v1147 = vld [vmem:[%s344 + $0x80] sm:$0xff]
      %v1148 = vld [vmem:[%s344 + $0x88] sm:$0xff]
      %v1149 = vld [vmem:[%s344 + $0x90] sm:$0xff]
      %v1150 = vld [vmem:[%s344 + $0x98] sm:$0xff]
      %v1151 = vld [vmem:[%s344 + $0xa0] sm:$0xff]
      %v1152 = vld [vmem:[%s344 + $0xa8] sm:$0xff]
      %v1153 = vld [vmem:[%s344 + $0xb0] sm:$0xff]
      %v1154 = vld [vmem:[%s344 + $0xb8] sm:$0xff]
      %v1155 = vld [vmem:[%s344 + $0xc0] sm:$0xff]
      %v1156 = vld [vmem:[%s344 + $0xc8] sm:$0xff]
      %v1157 = vld [vmem:[%s344 + $0xd0] sm:$0xff]
      %v1158 = vld [vmem:[%s344 + $0xd8] sm:$0xff]
      %v1159 = vld [vmem:[%s344 + $0xe0] sm:$0xff]
      %v1160 = vld [vmem:[%s344 + $0xe8] sm:$0xff]
      %v1161 = vld [vmem:[%s344 + $0xf0] sm:$0xff]
      %v1162 = vld [vmem:[%s344 + $0xf8] sm:$0xff]
      %v1163 = vld [vmem:[%s344 + $0x100] sm:$0xff]
      %v1164 = vld [vmem:[%s344 + $0x108] sm:$0xff]
      %v1165 = vld [vmem:[%s344 + $0x110] sm:$0xff]
      %v1166 = vld [vmem:[%s344 + $0x118] sm:$0xff]
      %v1167 = vld [vmem:[%s344 + $0x120] sm:$0xff]
      %v1168 = vld [vmem:[%s344 + $0x128] sm:$0xff]
      %v1169 = vld [vmem:[%s344 + $0x130] sm:$0xff]
      %v1170 = vld [vmem:[%s344 + $0x138] sm:$0xff]
      %v1171 = vld [vmem:[%s344 + $0x140] sm:$0xff]
      %v1172 = vld [vmem:[%s344 + $0x148] sm:$0xff]
      %v1173 = vld [vmem:[%s344 + $0x150] sm:$0xff]
      %v1174 = vld [vmem:[%s344 + $0x158] sm:$0xff]
      %v1175 = vld [vmem:[%s344 + $0x160] sm:$0xff]
      %v1176 = vld [vmem:[%s344 + $0x168] sm:$0xff]
      %v1177 = vld [vmem:[%s344 + $0x170] sm:$0xff]
      %v1178 = vld [vmem:[%s344 + $0x178] sm:$0xff]
      %v1179 = vld [vmem:[%s344 + $0x180] sm:$0xff]
      %v1180 = vld [vmem:[%s344 + $0x188] sm:$0xff]
      %v1181 = vld [vmem:[%s344 + $0x190] sm:$0xff]
      %v1182 = vld [vmem:[%s344 + $0x198] sm:$0xff]
      %v1183 = vld [vmem:[%s344 + $0x1a0] sm:$0xff]
      %v1184 = vld [vmem:[%s344 + $0x1a8] sm:$0xff]
      %v1185 = vld [vmem:[%s344 + $0x1b0] sm:$0xff]
      %v1186 = vld [vmem:[%s344 + $0x1b8] sm:$0xff]
      %v1187 = vld [vmem:[%s344 + $0x1c0] sm:$0xff]
      %v1188 = vld [vmem:[%s344 + $0x1c8] sm:$0xff]
      %v1189 = vld [vmem:[%s344 + $0x1d0] sm:$0xff]
      %v1190 = vld [vmem:[%s344 + $0x1d8] sm:$0xff]
      %v1191 = vld [vmem:[%s344 + $0x1e0] sm:$0xff]
      %v1192 = vld [vmem:[%s344 + $0x1e8] sm:$0xff]
      %v1193 = vmul.f32 %v1131, %v699
      %v1194 = vmul.f32 %v1132, %v704
      %v1195 = vmul.f32 %v1133, %v709
      %v1196 = vmul.f32 %v1134, %v714
      %v1197 = vmul.f32 %v1135, %v719
      %v1198 = vmul.f32 %v1136, %v724
      %v1199 = vmul.f32 %v1137, %v729
      %v1200 = vmul.f32 %v1138, %v734
      %v1201 = vmul.f32 %v1139, %v739
      %v1202 = vmul.f32 %v1140, %v744
      %v1203 = vmul.f32 %v1141, %v749
      %v1204 = vmul.f32 %v1142, %v754
      %v1205 = vmul.f32 %v1143, %v759
      %v1206 = vmul.f32 %v1144, %v764
      %v1207 = vmul.f32 %v1145, %v769
      %v1208 = vmul.f32 %v1146, %v774
      %v1209 = vmul.f32 %v1147, %v779
      %v1210 = vmul.f32 %v1148, %v784
      %v1211 = vmul.f32 %v1149, %v789
      %v1212 = vmul.f32 %v1150, %v794
      %v1213 = vmul.f32 %v1151, %v799
      %v1214 = vmul.f32 %v1152, %v804
      %v1215 = vmul.f32 %v1153, %v809
      %v1216 = vmul.f32 %v1154, %v814
      %v1217 = vmul.f32 %v1155, %v819
      %v1218 = vmul.f32 %v1156, %v824
      %v1219 = vmul.f32 %v1157, %v829
      %v1220 = vmul.f32 %v1158, %v834
      %v1221 = vmul.f32 %v1159, %v839
      %v1222 = vmul.f32 %v1160, %v844
      %v1223 = vmul.f32 %v1161, %v849
      %v1224 = vmul.f32 %v1162, %v854
      %v1225 = vmul.f32 %v1163, %v859
      %v1226 = vmul.f32 %v1164, %v864
      %v1227 = vmul.f32 %v1165, %v869
      %v1228 = vmul.f32 %v1166, %v874
      %v1229 = vmul.f32 %v1167, %v879
      %v1230 = vmul.f32 %v1168, %v884
      %v1231 = vmul.f32 %v1169, %v889
      %v1232 = vmul.f32 %v1170, %v894
      %v1233 = vmul.f32 %v1171, %v899
      %v1234 = vmul.f32 %v1172, %v904
      %v1235 = vmul.f32 %v1173, %v909
      %v1236 = vmul.f32 %v1174, %v914
      %v1237 = vmul.f32 %v1175, %v919
      %v1238 = vmul.f32 %v1176, %v924
      %v1239 = vmul.f32 %v1177, %v929
      %v1240 = vmul.f32 %v1178, %v934
      %v1241 = vmul.f32 %v1179, %v939
      %v1242 = vmul.f32 %v1180, %v944
      %v1243 = vmul.f32 %v1181, %v949
      %v1244 = vmul.f32 %v1182, %v954
      %v1245 = vmul.f32 %v1183, %v959
      %v1246 = vmul.f32 %v1184, %v964
      %v1247 = vmul.f32 %v1185, %v969
      %v1248 = vmul.f32 %v1186, %v974
      %v1249 = vmul.f32 %v1187, %v979
      %v1250 = vmul.f32 %v1188, %v984
      %v1251 = vmul.f32 %v1189, %v989
      %v1252 = vmul.f32 %v1190, %v994
      %v1253 = vmul.f32 %v1191, %v999
      %v1254 = vmul.f32 %v1192, %v1004
      %vm1255 = vcmp.gt.f32.partialorder %v1193, 0.0
      %vm1256 = vcmp.gt.f32.partialorder %v1194, 0.0
      %vm1257 = vcmp.gt.f32.partialorder %v1195, 0.0
      %vm1258 = vcmp.gt.f32.partialorder %v1196, 0.0
      %vm1259 = vcmp.gt.f32.partialorder %v1197, 0.0
      %vm1260 = vcmp.gt.f32.partialorder %v1198, 0.0
      %vm1261 = vcmp.gt.f32.partialorder %v1199, 0.0
      %vm1262 = vcmp.gt.f32.partialorder %v1200, 0.0
      %vm1263 = vcmp.gt.f32.partialorder %v1201, 0.0
      %vm1264 = vcmp.gt.f32.partialorder %v1202, 0.0
      %vm1265 = vcmp.gt.f32.partialorder %v1203, 0.0
      %vm1266 = vcmp.gt.f32.partialorder %v1204, 0.0
      %vm1267 = vcmp.gt.f32.partialorder %v1205, 0.0
      %vm1268 = vcmp.gt.f32.partialorder %v1206, 0.0
      %vm1269 = vcmp.gt.f32.partialorder %v1207, 0.0
      %vm1270 = vcmp.gt.f32.partialorder %v1208, 0.0
      %vm1271 = vcmp.gt.f32.partialorder %v1209, 0.0
      %vm1272 = vcmp.gt.f32.partialorder %v1210, 0.0
      %vm1273 = vcmp.gt.f32.partialorder %v1211, 0.0
      %vm1274 = vcmp.gt.f32.partialorder %v1212, 0.0
      %vm1275 = vcmp.gt.f32.partialorder %v1213, 0.0
      %vm1276 = vcmp.gt.f32.partialorder %v1214, 0.0
      %vm1277 = vcmp.gt.f32.partialorder %v1215, 0.0
      %vm1278 = vcmp.gt.f32.partialorder %v1216, 0.0
      %vm1279 = vcmp.gt.f32.partialorder %v1217, 0.0
      %vm1280 = vcmp.gt.f32.partialorder %v1218, 0.0
      %vm1281 = vcmp.gt.f32.partialorder %v1219, 0.0
      %vm1282 = vcmp.gt.f32.partialorder %v1220, 0.0
      %vm1283 = vcmp.gt.f32.partialorder %v1221, 0.0
      %vm1284 = vcmp.gt.f32.partialorder %v1222, 0.0
      %vm1285 = vcmp.gt.f32.partialorder %v1223, 0.0
      %vm1286 = vcmp.gt.f32.partialorder %v1224, 0.0
      %vm1287 = vcmp.gt.f32.partialorder %v1225, 0.0
      %vm1288 = vcmp.gt.f32.partialorder %v1226, 0.0
      %vm1289 = vcmp.gt.f32.partialorder %v1227, 0.0
      %vm1290 = vcmp.gt.f32.partialorder %v1228, 0.0
      %vm1291 = vcmp.gt.f32.partialorder %v1229, 0.0
      %vm1292 = vcmp.gt.f32.partialorder %v1230, 0.0
      %vm1293 = vcmp.gt.f32.partialorder %v1231, 0.0
      %vm1294 = vcmp.gt.f32.partialorder %v1232, 0.0
      %vm1295 = vcmp.gt.f32.partialorder %v1233, 0.0
      %vm1296 = vcmp.gt.f32.partialorder %v1234, 0.0
      %vm1297 = vcmp.gt.f32.partialorder %v1235, 0.0
      %vm1298 = vcmp.gt.f32.partialorder %v1236, 0.0
      %vm1299 = vcmp.gt.f32.partialorder %v1237, 0.0
      %vm1300 = vcmp.gt.f32.partialorder %v1238, 0.0
      %vm1301 = vcmp.gt.f32.partialorder %v1239, 0.0
      %vm1302 = vcmp.gt.f32.partialorder %v1240, 0.0
      %vm1303 = vcmp.gt.f32.partialorder %v1241, 0.0
      %vm1304 = vcmp.gt.f32.partialorder %v1242, 0.0
      %vm1305 = vcmp.gt.f32.partialorder %v1243, 0.0
      %vm1306 = vcmp.gt.f32.partialorder %v1244, 0.0
      %vm1307 = vcmp.gt.f32.partialorder %v1245, 0.0
      %vm1308 = vcmp.gt.f32.partialorder %v1246, 0.0
      %vm1309 = vcmp.gt.f32.partialorder %v1247, 0.0
      %vm1310 = vcmp.gt.f32.partialorder %v1248, 0.0
      %vm1311 = vcmp.gt.f32.partialorder %v1249, 0.0
      %vm1312 = vcmp.gt.f32.partialorder %v1250, 0.0
      %vm1313 = vcmp.gt.f32.partialorder %v1251, 0.0
      %vm1314 = vcmp.gt.f32.partialorder %v1252, 0.0
      %vm1315 = vcmp.gt.f32.partialorder %v1253, 0.0
      %vm1316 = vcmp.gt.f32.partialorder %v1254, 0.0
      %v1317 = vsel %vm1255, %v1193, 1.0
      %v1318 = vsel %vm1256, %v1194, 1.0
      %v1319 = vsel %vm1257, %v1195, 1.0
      %v1320 = vsel %vm1258, %v1196, 1.0
      %v1321 = vsel %vm1259, %v1197, 1.0
      %v1322 = vsel %vm1260, %v1198, 1.0
      %v1323 = vsel %vm1261, %v1199, 1.0
      %v1324 = vsel %vm1262, %v1200, 1.0
      %v1325 = vsel %vm1263, %v1201, 1.0
      %v1326 = vsel %vm1264, %v1202, 1.0
      %v1327 = vsel %vm1265, %v1203, 1.0
      %v1328 = vsel %vm1266, %v1204, 1.0
      %v1329 = vsel %vm1267, %v1205, 1.0
      %v1330 = vsel %vm1268, %v1206, 1.0
      %v1331 = vsel %vm1269, %v1207, 1.0
      %v1332 = vsel %vm1270, %v1208, 1.0
      %v1333 = vsel %vm1271, %v1209, 1.0
      %v1334 = vsel %vm1272, %v1210, 1.0
      %v1335 = vsel %vm1273, %v1211, 1.0
      %v1336 = vsel %vm1274, %v1212, 1.0
      %v1337 = vsel %vm1275, %v1213, 1.0
      %v1338 = vsel %vm1276, %v1214, 1.0
      %v1339 = vsel %vm1277, %v1215, 1.0
      %v1340 = vsel %vm1278, %v1216, 1.0
      %v1341 = vsel %vm1279, %v1217, 1.0
      %v1342 = vsel %vm1280, %v1218, 1.0
      %v1343 = vsel %vm1281, %v1219, 1.0
      %v1344 = vsel %vm1282, %v1220, 1.0
      %v1345 = vsel %vm1283, %v1221, 1.0
      %v1346 = vsel %vm1284, %v1222, 1.0
      %v1347 = vsel %vm1285, %v1223, 1.0
      %v1348 = vsel %vm1286, %v1224, 1.0
      %v1349 = vsel %vm1287, %v1225, 1.0
      %v1350 = vsel %vm1288, %v1226, 1.0
      %v1351 = vsel %vm1289, %v1227, 1.0
      %v1352 = vsel %vm1290, %v1228, 1.0
      %v1353 = vsel %vm1291, %v1229, 1.0
      %v1354 = vsel %vm1292, %v1230, 1.0
      %v1355 = vsel %vm1293, %v1231, 1.0
      %v1356 = vsel %vm1294, %v1232, 1.0
      %v1357 = vsel %vm1295, %v1233, 1.0
      %v1358 = vsel %vm1296, %v1234, 1.0
      %v1359 = vsel %vm1297, %v1235, 1.0
      %v1360 = vsel %vm1298, %v1236, 1.0
      %v1361 = vsel %vm1299, %v1237, 1.0
      %v1362 = vsel %vm1300, %v1238, 1.0
      %v1363 = vsel %vm1301, %v1239, 1.0
      %v1364 = vsel %vm1302, %v1240, 1.0
      %v1365 = vsel %vm1303, %v1241, 1.0
      %v1366 = vsel %vm1304, %v1242, 1.0
      %v1367 = vsel %vm1305, %v1243, 1.0
      %v1368 = vsel %vm1306, %v1244, 1.0
      %v1369 = vsel %vm1307, %v1245, 1.0
      %v1370 = vsel %vm1308, %v1246, 1.0
      %v1371 = vsel %vm1309, %v1247, 1.0
      %v1372 = vsel %vm1310, %v1248, 1.0
      %v1373 = vsel %vm1311, %v1249, 1.0
      %v1374 = vsel %vm1312, %v1250, 1.0
      %v1375 = vsel %vm1313, %v1251, 1.0
      %v1376 = vsel %vm1314, %v1252, 1.0
      %v1377 = vsel %vm1315, %v1253, 1.0
      %v1378 = vsel %vm1316, %v1254, 1.0
      %v1379 = vlog2.pop %v1317
      %v1380 = vmul.f32 %v1379, 0.6931472
      %v1381 = vlog2.pop %v1318
      %v1382 = vmul.f32 %v1381, 0.6931472
      %v1383 = vlog2.pop %v1319
      %v1384 = vmul.f32 %v1383, 0.6931472
      %v1385 = vlog2.pop %v1320
      %v1386 = vmul.f32 %v1385, 0.6931472
      %v1387 = vlog2.pop %v1321
      %v1388 = vmul.f32 %v1387, 0.6931472
      %v1389 = vlog2.pop %v1322
      %v1390 = vmul.f32 %v1389, 0.6931472
      %v1391 = vlog2.pop %v1323
      %v1392 = vmul.f32 %v1391, 0.6931472
      %v1393 = vlog2.pop %v1324
      %v1394 = vmul.f32 %v1393, 0.6931472
      %v1395 = vlog2.pop %v1325
      %v1396 = vmul.f32 %v1395, 0.6931472
      %v1397 = vlog2.pop %v1326
      %v1398 = vmul.f32 %v1397, 0.6931472
      %v1399 = vlog2.pop %v1327
      %v1400 = vmul.f32 %v1399, 0.6931472
      %v1401 = vlog2.pop %v1328
      %v1402 = vmul.f32 %v1401, 0.6931472
      %v1403 = vlog2.pop %v1329
      %v1404 = vmul.f32 %v1403, 0.6931472
      %v1405 = vlog2.pop %v1330
      %v1406 = vmul.f32 %v1405, 0.6931472
      %v1407 = vlog2.pop %v1331
      %v1408 = vmul.f32 %v1407, 0.6931472
      %v1409 = vlog2.pop %v1332
      %v1410 = vmul.f32 %v1409, 0.6931472
      %v1411 = vlog2.pop %v1333
      %v1412 = vmul.f32 %v1411, 0.6931472
      %v1413 = vlog2.pop %v1334
      %v1414 = vmul.f32 %v1413, 0.6931472
      %v1415 = vlog2.pop %v1335
      %v1416 = vmul.f32 %v1415, 0.6931472
      %v1417 = vlog2.pop %v1336
      %v1418 = vmul.f32 %v1417, 0.6931472
      %v1419 = vlog2.pop %v1337
      %v1420 = vmul.f32 %v1419, 0.6931472
      %v1421 = vlog2.pop %v1338
      %v1422 = vmul.f32 %v1421, 0.6931472
      %v1423 = vlog2.pop %v1339
      %v1424 = vmul.f32 %v1423, 0.6931472
      %v1425 = vlog2.pop %v1340
      %v1426 = vmul.f32 %v1425, 0.6931472
      %v1427 = vlog2.pop %v1341
      %v1428 = vmul.f32 %v1427, 0.6931472
      %v1429 = vlog2.pop %v1342
      %v1430 = vmul.f32 %v1429, 0.6931472
      %v1431 = vlog2.pop %v1343
      %v1432 = vmul.f32 %v1431, 0.6931472
      %v1433 = vlog2.pop %v1344
      %v1434 = vmul.f32 %v1433, 0.6931472
      %v1435 = vlog2.pop %v1345
      %v1436 = vmul.f32 %v1435, 0.6931472
      %v1437 = vlog2.pop %v1346
      %v1438 = vmul.f32 %v1437, 0.6931472
      %v1439 = vlog2.pop %v1347
      %v1440 = vmul.f32 %v1439, 0.6931472
      %v1441 = vlog2.pop %v1348
      %v1442 = vmul.f32 %v1441, 0.6931472
      %v1443 = vlog2.pop %v1349
      %v1444 = vmul.f32 %v1443, 0.6931472
      %v1445 = vlog2.pop %v1350
      %v1446 = vmul.f32 %v1445, 0.6931472
      %v1447 = vlog2.pop %v1351
      %v1448 = vmul.f32 %v1447, 0.6931472
      %v1449 = vlog2.pop %v1352
      %v1450 = vmul.f32 %v1449, 0.6931472
      %v1451 = vlog2.pop %v1353
      %v1452 = vmul.f32 %v1451, 0.6931472
      %v1453 = vlog2.pop %v1354
      %v1454 = vmul.f32 %v1453, 0.6931472
      %v1455 = vlog2.pop %v1355
      %v1456 = vmul.f32 %v1455, 0.6931472
      %v1457 = vlog2.pop %v1356
      %v1458 = vmul.f32 %v1457, 0.6931472
      %v1459 = vlog2.pop %v1357
      %v1460 = vmul.f32 %v1459, 0.6931472
      %v1461 = vlog2.pop %v1358
      %v1462 = vmul.f32 %v1461, 0.6931472
      %v1463 = vlog2.pop %v1359
      %v1464 = vmul.f32 %v1463, 0.6931472
      %v1465 = vlog2.pop %v1360
      %v1466 = vmul.f32 %v1465, 0.6931472
      %v1467 = vlog2.pop %v1361
      %v1468 = vmul.f32 %v1467, 0.6931472
      %v1469 = vlog2.pop %v1362
      %v1470 = vmul.f32 %v1469, 0.6931472
      %v1471 = vlog2.pop %v1363
      %v1472 = vmul.f32 %v1471, 0.6931472
      %v1473 = vlog2.pop %v1364
      %v1474 = vmul.f32 %v1473, 0.6931472
      %v1475 = vlog2.pop %v1365
      %v1476 = vmul.f32 %v1475, 0.6931472
      %v1477 = vlog2.pop %v1366
      %v1478 = vmul.f32 %v1477, 0.6931472
      %v1479 = vlog2.pop %v1367
      %v1480 = vmul.f32 %v1479, 0.6931472
      %v1481 = vlog2.pop %v1368
      %v1482 = vmul.f32 %v1481, 0.6931472
      %v1483 = vlog2.pop %v1369
      %v1484 = vmul.f32 %v1483, 0.6931472
      %v1485 = vlog2.pop %v1370
      %v1486 = vmul.f32 %v1485, 0.6931472
      %v1487 = vlog2.pop %v1371
      %v1488 = vmul.f32 %v1487, 0.6931472
      %v1489 = vlog2.pop %v1372
      %v1490 = vmul.f32 %v1489, 0.6931472
      %v1491 = vlog2.pop %v1373
      %v1492 = vmul.f32 %v1491, 0.6931472
      %v1493 = vlog2.pop %v1374
      %v1494 = vmul.f32 %v1493, 0.6931472
      %v1495 = vlog2.pop %v1375
      %v1496 = vmul.f32 %v1495, 0.6931472
      %v1497 = vlog2.pop %v1376
      %v1498 = vmul.f32 %v1497, 0.6931472
      %v1499 = vlog2.pop %v1377
      %v1500 = vmul.f32 %v1499, 0.6931472
      %v1501 = vlog2.pop %v1378
      %v1502 = vmul.f32 %v1501, 0.6931472
      %v1503 = vmul.f32 %v1193, %v1380
      %v1504 = vmul.f32 %v1194, %v1382
      %v1505 = vmul.f32 %v1195, %v1384
      %v1506 = vmul.f32 %v1196, %v1386
      %v1507 = vmul.f32 %v1197, %v1388
      %v1508 = vmul.f32 %v1198, %v1390
      %v1509 = vmul.f32 %v1199, %v1392
      %v1510 = vmul.f32 %v1200, %v1394
      %v1511 = vmul.f32 %v1201, %v1396
      %v1512 = vmul.f32 %v1202, %v1398
      %v1513 = vmul.f32 %v1203, %v1400
      %v1514 = vmul.f32 %v1204, %v1402
      %v1515 = vmul.f32 %v1205, %v1404
      %v1516 = vmul.f32 %v1206, %v1406
      %v1517 = vmul.f32 %v1207, %v1408
      %v1518 = vmul.f32 %v1208, %v1410
      %v1519 = vmul.f32 %v1209, %v1412
      %v1520 = vmul.f32 %v1210, %v1414
      %v1521 = vmul.f32 %v1211, %v1416
      %v1522 = vmul.f32 %v1212, %v1418
      %v1523 = vmul.f32 %v1213, %v1420
      %v1524 = vmul.f32 %v1214, %v1422
      %v1525 = vmul.f32 %v1215, %v1424
      %v1526 = vmul.f32 %v1216, %v1426
      %v1527 = vmul.f32 %v1217, %v1428
      %v1528 = vmul.f32 %v1218, %v1430
      %v1529 = vmul.f32 %v1219, %v1432
      %v1530 = vmul.f32 %v1220, %v1434
      %v1531 = vmul.f32 %v1221, %v1436
      %v1532 = vmul.f32 %v1222, %v1438
      %v1533 = vmul.f32 %v1223, %v1440
      %v1534 = vmul.f32 %v1224, %v1442
      %v1535 = vmul.f32 %v1225, %v1444
      %v1536 = vmul.f32 %v1226, %v1446
      %v1537 = vmul.f32 %v1227, %v1448
      %v1538 = vmul.f32 %v1228, %v1450
      %v1539 = vmul.f32 %v1229, %v1452
      %v1540 = vmul.f32 %v1230, %v1454
      %v1541 = vmul.f32 %v1231, %v1456
      %v1542 = vmul.f32 %v1232, %v1458
      %v1543 = vmul.f32 %v1233, %v1460
      %v1544 = vmul.f32 %v1234, %v1462
      %v1545 = vmul.f32 %v1235, %v1464
      %v1546 = vmul.f32 %v1236, %v1466
      %v1547 = vmul.f32 %v1237, %v1468
      %v1548 = vmul.f32 %v1238, %v1470
      %v1549 = vmul.f32 %v1239, %v1472
      %v1550 = vmul.f32 %v1240, %v1474
      %v1551 = vmul.f32 %v1241, %v1476
      %v1552 = vmul.f32 %v1242, %v1478
      %v1553 = vmul.f32 %v1243, %v1480
      %v1554 = vmul.f32 %v1244, %v1482
      %v1555 = vmul.f32 %v1245, %v1484
      %v1556 = vmul.f32 %v1246, %v1486
      %v1557 = vmul.f32 %v1247, %v1488
      %v1558 = vmul.f32 %v1248, %v1490
      %v1559 = vmul.f32 %v1249, %v1492
      %v1560 = vmul.f32 %v1250, %v1494
      %v1561 = vmul.f32 %v1251, %v1496
      %v1562 = vmul.f32 %v1252, %v1498
      %v1563 = vmul.f32 %v1253, %v1500
      %v1564 = vmul.f32 %v1254, %v1502
      %v1565 = vsel %vm1255, %v1503, 0.0
      %v1566 = vsel %vm1256, %v1504, 0.0
      %v1567 = vsel %vm1257, %v1505, 0.0
      %v1568 = vsel %vm1258, %v1506, 0.0
      %v1569 = vsel %vm1259, %v1507, 0.0
      %v1570 = vsel %vm1260, %v1508, 0.0
      %v1571 = vsel %vm1261, %v1509, 0.0
      %v1572 = vsel %vm1262, %v1510, 0.0
      %v1573 = vsel %vm1263, %v1511, 0.0
      %v1574 = vsel %vm1264, %v1512, 0.0
      %v1575 = vsel %vm1265, %v1513, 0.0
      %v1576 = vsel %vm1266, %v1514, 0.0
      %v1577 = vsel %vm1267, %v1515, 0.0
      %v1578 = vsel %vm1268, %v1516, 0.0
      %v1579 = vsel %vm1269, %v1517, 0.0
      %v1580 = vsel %vm1270, %v1518, 0.0
      %v1581 = vsel %vm1271, %v1519, 0.0
      %v1582 = vsel %vm1272, %v1520, 0.0
      %v1583 = vsel %vm1273, %v1521, 0.0
      %v1584 = vsel %vm1274, %v1522, 0.0
      %v1585 = vsel %vm1275, %v1523, 0.0
      %v1586 = vsel %vm1276, %v1524, 0.0
      %v1587 = vsel %vm1277, %v1525, 0.0
      %v1588 = vsel %vm1278, %v1526, 0.0
      %v1589 = vsel %vm1279, %v1527, 0.0
      %v1590 = vsel %vm1280, %v1528, 0.0
      %v1591 = vsel %vm1281, %v1529, 0.0
      %v1592 = vsel %vm1282, %v1530, 0.0
      %v1593 = vsel %vm1283, %v1531, 0.0
      %v1594 = vsel %vm1284, %v1532, 0.0
      %v1595 = vsel %vm1285, %v1533, 0.0
      %v1596 = vsel %vm1286, %v1534, 0.0
      %v1597 = vsel %vm1287, %v1535, 0.0
      %v1598 = vsel %vm1288, %v1536, 0.0
      %v1599 = vsel %vm1289, %v1537, 0.0
      %v1600 = vsel %vm1290, %v1538, 0.0
      %v1601 = vsel %vm1291, %v1539, 0.0
      %v1602 = vsel %vm1292, %v1540, 0.0
      %v1603 = vsel %vm1293, %v1541, 0.0
      %v1604 = vsel %vm1294, %v1542, 0.0
      %v1605 = vsel %vm1295, %v1543, 0.0
      %v1606 = vsel %vm1296, %v1544, 0.0
      %v1607 = vsel %vm1297, %v1545, 0.0
      %v1608 = vsel %vm1298, %v1546, 0.0
      %v1609 = vsel %vm1299, %v1547, 0.0
      %v1610 = vsel %vm1300, %v1548, 0.0
      %v1611 = vsel %vm1301, %v1549, 0.0
      %v1612 = vsel %vm1302, %v1550, 0.0
      %v1613 = vsel %vm1303, %v1551, 0.0
      %v1614 = vsel %vm1304, %v1552, 0.0
      %v1615 = vsel %vm1305, %v1553, 0.0
      %v1616 = vsel %vm1306, %v1554, 0.0
      %v1617 = vsel %vm1307, %v1555, 0.0
      %v1618 = vsel %vm1308, %v1556, 0.0
      %v1619 = vsel %vm1309, %v1557, 0.0
      %v1620 = vsel %vm1310, %v1558, 0.0
      %v1621 = vsel %vm1311, %v1559, 0.0
      %v1622 = vsel %vm1312, %v1560, 0.0
      %v1623 = vsel %vm1313, %v1561, 0.0
      %v1624 = vsel %vm1314, %v1562, 0.0
      %v1625 = vsel %vm1315, %v1563, 0.0
      %v1626 = vsel %vm1316, %v1564, 0.0
      %v1627 = vmul.f32 %v1193, %v1069
      %v1628 = vmul.f32 %v1194, %v1070
      %v1629 = vmul.f32 %v1195, %v1071
      %v1630 = vmul.f32 %v1196, %v1072
      %v1631 = vmul.f32 %v1197, %v1073
      %v1632 = vmul.f32 %v1198, %v1074
      %v1633 = vmul.f32 %v1199, %v1075
      %v1634 = vmul.f32 %v1200, %v1076
      %v1635 = vmul.f32 %v1201, %v1077
      %v1636 = vmul.f32 %v1202, %v1078
      %v1637 = vmul.f32 %v1203, %v1079
      %v1638 = vmul.f32 %v1204, %v1080
      %v1639 = vmul.f32 %v1205, %v1081
      %v1640 = vmul.f32 %v1206, %v1082
      %v1641 = vmul.f32 %v1207, %v1083
      %v1642 = vmul.f32 %v1208, %v1084
      %v1643 = vmul.f32 %v1209, %v1085
      %v1644 = vmul.f32 %v1210, %v1086
      %v1645 = vmul.f32 %v1211, %v1087
      %v1646 = vmul.f32 %v1212, %v1088
      %v1647 = vmul.f32 %v1213, %v1089
      %v1648 = vmul.f32 %v1214, %v1090
      %v1649 = vmul.f32 %v1215, %v1091
      %v1650 = vmul.f32 %v1216, %v1092
      %v1651 = vmul.f32 %v1217, %v1093
      %v1652 = vmul.f32 %v1218, %v1094
      %v1653 = vmul.f32 %v1219, %v1095
      %v1654 = vmul.f32 %v1220, %v1096
      %v1655 = vmul.f32 %v1221, %v1097
      %v1656 = vmul.f32 %v1222, %v1098
      %v1657 = vmul.f32 %v1223, %v1099
      %v1658 = vmul.f32 %v1224, %v1100
      %v1659 = vmul.f32 %v1225, %v1101
      %v1660 = vmul.f32 %v1226, %v1102
      %v1661 = vmul.f32 %v1227, %v1103
      %v1662 = vmul.f32 %v1228, %v1104
      %v1663 = vmul.f32 %v1229, %v1105
      %v1664 = vmul.f32 %v1230, %v1106
      %v1665 = vmul.f32 %v1231, %v1107
      %v1666 = vmul.f32 %v1232, %v1108
      %v1667 = vmul.f32 %v1233, %v1109
      %v1668 = vmul.f32 %v1234, %v1110
      %v1669 = vmul.f32 %v1235, %v1111
      %v1670 = vmul.f32 %v1236, %v1112
      %v1671 = vmul.f32 %v1237, %v1113
      %v1672 = vmul.f32 %v1238, %v1114
      %v1673 = vmul.f32 %v1239, %v1115
      %v1674 = vmul.f32 %v1240, %v1116
      %v1675 = vmul.f32 %v1241, %v1117
      %v1676 = vmul.f32 %v1242, %v1118
      %v1677 = vmul.f32 %v1243, %v1119
      %v1678 = vmul.f32 %v1244, %v1120
      %v1679 = vmul.f32 %v1245, %v1121
      %v1680 = vmul.f32 %v1246, %v1122
      %v1681 = vmul.f32 %v1247, %v1123
      %v1682 = vmul.f32 %v1248, %v1124
      %v1683 = vmul.f32 %v1249, %v1125
      %v1684 = vmul.f32 %v1250, %v1126
      %v1685 = vmul.f32 %v1251, %v1127
      %v1686 = vmul.f32 %v1252, %v1128
      %v1687 = vmul.f32 %v1253, %v1129
      %v1688 = vmul.f32 %v1254, %v1130
      %v1689 = vsub.f32 %v1565, %v1627
      %v1690 = vsub.f32 %v1566, %v1628
      %v1691 = vsub.f32 %v1567, %v1629
      %v1692 = vsub.f32 %v1568, %v1630
      %v1693 = vsub.f32 %v1569, %v1631
      %v1694 = vsub.f32 %v1570, %v1632
      %v1695 = vsub.f32 %v1571, %v1633
      %v1696 = vsub.f32 %v1572, %v1634
      %v1697 = vsub.f32 %v1573, %v1635
      %v1698 = vsub.f32 %v1574, %v1636
      %v1699 = vsub.f32 %v1575, %v1637
      %v1700 = vsub.f32 %v1576, %v1638
      %v1701 = vsub.f32 %v1577, %v1639
      %v1702 = vsub.f32 %v1578, %v1640
      %v1703 = vsub.f32 %v1579, %v1641
      %v1704 = vsub.f32 %v1580, %v1642
      %v1705 = vsub.f32 %v1581, %v1643
      %v1706 = vsub.f32 %v1582, %v1644
      %v1707 = vsub.f32 %v1583, %v1645
      %v1708 = vsub.f32 %v1584, %v1646
      %v1709 = vsub.f32 %v1585, %v1647
      %v1710 = vsub.f32 %v1586, %v1648
      %v1711 = vsub.f32 %v1587, %v1649
      %v1712 = vsub.f32 %v1588, %v1650
      %v1713 = vsub.f32 %v1589, %v1651
      %v1714 = vsub.f32 %v1590, %v1652
      %v1715 = vsub.f32 %v1591, %v1653
      %v1716 = vsub.f32 %v1592, %v1654
      %v1717 = vsub.f32 %v1593, %v1655
      %v1718 = vsub.f32 %v1594, %v1656
      %v1719 = vsub.f32 %v1595, %v1657
      %v1720 = vsub.f32 %v1596, %v1658
      %v1721 = vsub.f32 %v1597, %v1659
      %v1722 = vsub.f32 %v1598, %v1660
      %v1723 = vsub.f32 %v1599, %v1661
      %v1724 = vsub.f32 %v1600, %v1662
      %v1725 = vsub.f32 %v1601, %v1663
      %v1726 = vsub.f32 %v1602, %v1664
      %v1727 = vsub.f32 %v1603, %v1665
      %v1728 = vsub.f32 %v1604, %v1666
      %v1729 = vsub.f32 %v1605, %v1667
      %v1730 = vsub.f32 %v1606, %v1668
      %v1731 = vsub.f32 %v1607, %v1669
      %v1732 = vsub.f32 %v1608, %v1670
      %v1733 = vsub.f32 %v1609, %v1671
      %v1734 = vsub.f32 %v1610, %v1672
      %v1735 = vsub.f32 %v1611, %v1673
      %v1736 = vsub.f32 %v1612, %v1674
      %v1737 = vsub.f32 %v1613, %v1675
      %v1738 = vsub.f32 %v1614, %v1676
      %v1739 = vsub.f32 %v1615, %v1677
      %v1740 = vsub.f32 %v1616, %v1678
      %v1741 = vsub.f32 %v1617, %v1679
      %v1742 = vsub.f32 %v1618, %v1680
      %v1743 = vsub.f32 %v1619, %v1681
      %v1744 = vsub.f32 %v1620, %v1682
      %v1745 = vsub.f32 %v1621, %v1683
      %v1746 = vsub.f32 %v1622, %v1684
      %v1747 = vsub.f32 %v1623, %v1685
      %v1748 = vsub.f32 %v1624, %v1686
      %v1749 = vsub.f32 %v1625, %v1687
      %v1750 = vsub.f32 %v1626, %v1688
      %s1751 = sadd.s32 %s19, %s20
      %s1752 = smul.u32 %s1751, 496
      %s1753 = ssub.s32 500, %s1752
      %v1754 = vlaneseq
      %v1755 = vshrl.u32 %v1754, 7
      %v1756 = vadd.s32 %v1755, 8
      %v1757 = vadd.s32 %v1755, 16
      %v1758 = vadd.s32 %v1755, 24
      %v1759 = vadd.s32 %v1755, 32
      %v1760 = vadd.s32 %v1755, 40
      %v1761 = vadd.s32 %v1755, 48
      %v1762 = vadd.s32 %v1755, 56
      %v1763 = vadd.s32 %v1755, 64
      %v1764 = vadd.s32 %v1755, 72
      %v1765 = vadd.s32 %v1755, 80
      %v1766 = vadd.s32 %v1755, 88
      %v1767 = vadd.s32 %v1755, 96
      %v1768 = vadd.s32 %v1755, 104
      %v1769 = vadd.s32 %v1755, 112
      %v1770 = vadd.s32 %v1755, 120
      %v1771 = vadd.s32 %v1755, 128
      %v1772 = vadd.s32 %v1755, 136
      %v1773 = vadd.s32 %v1755, 144
      %v1774 = vadd.s32 %v1755, 152
      %v1775 = vadd.s32 %v1755, 160
      %v1776 = vadd.s32 %v1755, 168
      %v1777 = vadd.s32 %v1755, 176
      %v1778 = vadd.s32 %v1755, 184
      %v1779 = vadd.s32 %v1755, 192
      %v1780 = vadd.s32 %v1755, 200
      %v1781 = vadd.s32 %v1755, 208
      %v1782 = vadd.s32 %v1755, 216
      %v1783 = vadd.s32 %v1755, 224
      %v1784 = vadd.s32 %v1755, 232
      %v1785 = vadd.s32 %v1755, 240
      %v1786 = vadd.s32 %v1755, 248
      %v1787 = vadd.s32 %v1755, 256
      %v1788 = vadd.s32 %v1755, 264
      %v1789 = vadd.s32 %v1755, 272
      %v1790 = vadd.s32 %v1755, 280
      %v1791 = vadd.s32 %v1755, 288
      %v1792 = vadd.s32 %v1755, 296
      %v1793 = vadd.s32 %v1755, 304
      %v1794 = vadd.s32 %v1755, 312
      %v1795 = vadd.s32 %v1755, 320
      %v1796 = vadd.s32 %v1755, 328
      %v1797 = vadd.s32 %v1755, 336
      %v1798 = vadd.s32 %v1755, 344
      %v1799 = vadd.s32 %v1755, 352
      %v1800 = vadd.s32 %v1755, 360
      %v1801 = vadd.s32 %v1755, 368
      %v1802 = vadd.s32 %v1755, 376
      %v1803 = vadd.s32 %v1755, 384
      %v1804 = vadd.s32 %v1755, 392
      %v1805 = vadd.s32 %v1755, 400
      %v1806 = vadd.s32 %v1755, 408
      %v1807 = vadd.s32 %v1755, 416
      %v1808 = vadd.s32 %v1755, 424
      %v1809 = vadd.s32 %v1755, 432
      %v1810 = vadd.s32 %v1755, 440
      %v1811 = vadd.s32 %v1755, 448
      %v1812 = vadd.s32 %v1755, 456
      %v1813 = vadd.s32 %v1755, 464
      %v1814 = vadd.s32 %v1755, 472
      %v1815 = vadd.s32 %v1755, 480
      %v1816 = vadd.s32 %v1755, 488
      %v1817 = vstv %s1753
      %vm1818 = vcmp.lt.s32.totalorder %v1755, %v1817
      %vm1819 = vcmp.lt.s32.totalorder %v1756, %v1817
      %vm1820 = vcmp.lt.s32.totalorder %v1757, %v1817
      %vm1821 = vcmp.lt.s32.totalorder %v1758, %v1817
      %vm1822 = vcmp.lt.s32.totalorder %v1759, %v1817
      %vm1823 = vcmp.lt.s32.totalorder %v1760, %v1817
      %vm1824 = vcmp.lt.s32.totalorder %v1761, %v1817
      %vm1825 = vcmp.lt.s32.totalorder %v1762, %v1817
      %vm1826 = vcmp.lt.s32.totalorder %v1763, %v1817
      %vm1827 = vcmp.lt.s32.totalorder %v1764, %v1817
      %vm1828 = vcmp.lt.s32.totalorder %v1765, %v1817
      %vm1829 = vcmp.lt.s32.totalorder %v1766, %v1817
      %vm1830 = vcmp.lt.s32.totalorder %v1767, %v1817
      %vm1831 = vcmp.lt.s32.totalorder %v1768, %v1817
      %vm1832 = vcmp.lt.s32.totalorder %v1769, %v1817
      %vm1833 = vcmp.lt.s32.totalorder %v1770, %v1817
      %vm1834 = vcmp.lt.s32.totalorder %v1771, %v1817
      %vm1835 = vcmp.lt.s32.totalorder %v1772, %v1817
      %vm1836 = vcmp.lt.s32.totalorder %v1773, %v1817
      %vm1837 = vcmp.lt.s32.totalorder %v1774, %v1817
      %vm1838 = vcmp.lt.s32.totalorder %v1775, %v1817
      %vm1839 = vcmp.lt.s32.totalorder %v1776, %v1817
      %vm1840 = vcmp.lt.s32.totalorder %v1777, %v1817
      %vm1841 = vcmp.lt.s32.totalorder %v1778, %v1817
      %vm1842 = vcmp.lt.s32.totalorder %v1779, %v1817
      %vm1843 = vcmp.lt.s32.totalorder %v1780, %v1817
      %vm1844 = vcmp.lt.s32.totalorder %v1781, %v1817
      %vm1845 = vcmp.lt.s32.totalorder %v1782, %v1817
      %vm1846 = vcmp.lt.s32.totalorder %v1783, %v1817
      %vm1847 = vcmp.lt.s32.totalorder %v1784, %v1817
      %vm1848 = vcmp.lt.s32.totalorder %v1785, %v1817
      %vm1849 = vcmp.lt.s32.totalorder %v1786, %v1817
      %vm1850 = vcmp.lt.s32.totalorder %v1787, %v1817
      %vm1851 = vcmp.lt.s32.totalorder %v1788, %v1817
      %vm1852 = vcmp.lt.s32.totalorder %v1789, %v1817
      %vm1853 = vcmp.lt.s32.totalorder %v1790, %v1817
      %vm1854 = vcmp.lt.s32.totalorder %v1791, %v1817
      %vm1855 = vcmp.lt.s32.totalorder %v1792, %v1817
      %vm1856 = vcmp.lt.s32.totalorder %v1793, %v1817
      %vm1857 = vcmp.lt.s32.totalorder %v1794, %v1817
      %vm1858 = vcmp.lt.s32.totalorder %v1795, %v1817
      %vm1859 = vcmp.lt.s32.totalorder %v1796, %v1817
      %vm1860 = vcmp.lt.s32.totalorder %v1797, %v1817
      %vm1861 = vcmp.lt.s32.totalorder %v1798, %v1817
      %vm1862 = vcmp.lt.s32.totalorder %v1799, %v1817
      %vm1863 = vcmp.lt.s32.totalorder %v1800, %v1817
      %vm1864 = vcmp.lt.s32.totalorder %v1801, %v1817
      %vm1865 = vcmp.lt.s32.totalorder %v1802, %v1817
      %vm1866 = vcmp.lt.s32.totalorder %v1803, %v1817
      %vm1867 = vcmp.lt.s32.totalorder %v1804, %v1817
      %vm1868 = vcmp.lt.s32.totalorder %v1805, %v1817
      %vm1869 = vcmp.lt.s32.totalorder %v1806, %v1817
      %vm1870 = vcmp.lt.s32.totalorder %v1807, %v1817
      %vm1871 = vcmp.lt.s32.totalorder %v1808, %v1817
      %vm1872 = vcmp.lt.s32.totalorder %v1809, %v1817
      %vm1873 = vcmp.lt.s32.totalorder %v1810, %v1817
      %vm1874 = vcmp.lt.s32.totalorder %v1811, %v1817
      %vm1875 = vcmp.lt.s32.totalorder %v1812, %v1817
      %vm1876 = vcmp.lt.s32.totalorder %v1813, %v1817
      %vm1877 = vcmp.lt.s32.totalorder %v1814, %v1817
      %vm1878 = vcmp.lt.s32.totalorder %v1815, %v1817
      %vm1879 = vcmp.lt.s32.totalorder %v1816, %v1817
      %v1880 = vsel %vm1818, 1, 0
      %v1881 = vsel %vm1819, 1, 0
      %v1882 = vsel %vm1820, 1, 0
      %v1883 = vsel %vm1821, 1, 0
      %v1884 = vsel %vm1822, 1, 0
      %v1885 = vsel %vm1823, 1, 0
      %v1886 = vsel %vm1824, 1, 0
      %v1887 = vsel %vm1825, 1, 0
      %v1888 = vsel %vm1826, 1, 0
      %v1889 = vsel %vm1827, 1, 0
      %v1890 = vsel %vm1828, 1, 0
      %v1891 = vsel %vm1829, 1, 0
      %v1892 = vsel %vm1830, 1, 0
      %v1893 = vsel %vm1831, 1, 0
      %v1894 = vsel %vm1832, 1, 0
      %v1895 = vsel %vm1833, 1, 0
      %v1896 = vsel %vm1834, 1, 0
      %v1897 = vsel %vm1835, 1, 0
      %v1898 = vsel %vm1836, 1, 0
      %v1899 = vsel %vm1837, 1, 0
      %v1900 = vsel %vm1838, 1, 0
      %v1901 = vsel %vm1839, 1, 0
      %v1902 = vsel %vm1840, 1, 0
      %v1903 = vsel %vm1841, 1, 0
      %v1904 = vsel %vm1842, 1, 0
      %v1905 = vsel %vm1843, 1, 0
      %v1906 = vsel %vm1844, 1, 0
      %v1907 = vsel %vm1845, 1, 0
      %v1908 = vsel %vm1846, 1, 0
      %v1909 = vsel %vm1847, 1, 0
      %v1910 = vsel %vm1848, 1, 0
      %v1911 = vsel %vm1849, 1, 0
      %v1912 = vsel %vm1850, 1, 0
      %v1913 = vsel %vm1851, 1, 0
      %v1914 = vsel %vm1852, 1, 0
      %v1915 = vsel %vm1853, 1, 0
      %v1916 = vsel %vm1854, 1, 0
      %v1917 = vsel %vm1855, 1, 0
      %v1918 = vsel %vm1856, 1, 0
      %v1919 = vsel %vm1857, 1, 0
      %v1920 = vsel %vm1858, 1, 0
      %v1921 = vsel %vm1859, 1, 0
      %v1922 = vsel %vm1860, 1, 0
      %v1923 = vsel %vm1861, 1, 0
      %v1924 = vsel %vm1862, 1, 0
      %v1925 = vsel %vm1863, 1, 0
      %v1926 = vsel %vm1864, 1, 0
      %v1927 = vsel %vm1865, 1, 0
      %v1928 = vsel %vm1866, 1, 0
      %v1929 = vsel %vm1867, 1, 0
      %v1930 = vsel %vm1868, 1, 0
      %v1931 = vsel %vm1869, 1, 0
      %v1932 = vsel %vm1870, 1, 0
      %v1933 = vsel %vm1871, 1, 0
      %v1934 = vsel %vm1872, 1, 0
      %v1935 = vsel %vm1873, 1, 0
      %v1936 = vsel %vm1874, 1, 0
      %v1937 = vsel %vm1875, 1, 0
      %v1938 = vsel %vm1876, 1, 0
      %v1939 = vsel %vm1877, 1, 0
      %v1940 = vsel %vm1878, 1, 0
      %v1941 = vsel %vm1879, 1, 0
      %vm1942 = vcmp.eq.s32.totalorder %v1880, 1
      %vm1943 = vcmp.eq.s32.totalorder %v1881, 1
      %vm1944 = vcmp.eq.s32.totalorder %v1882, 1
      %vm1945 = vcmp.eq.s32.totalorder %v1883, 1
      %vm1946 = vcmp.eq.s32.totalorder %v1884, 1
      %vm1947 = vcmp.eq.s32.totalorder %v1885, 1
      %vm1948 = vcmp.eq.s32.totalorder %v1886, 1
      %vm1949 = vcmp.eq.s32.totalorder %v1887, 1
      %vm1950 = vcmp.eq.s32.totalorder %v1888, 1
      %vm1951 = vcmp.eq.s32.totalorder %v1889, 1
      %vm1952 = vcmp.eq.s32.totalorder %v1890, 1
      %vm1953 = vcmp.eq.s32.totalorder %v1891, 1
      %vm1954 = vcmp.eq.s32.totalorder %v1892, 1
      %vm1955 = vcmp.eq.s32.totalorder %v1893, 1
      %vm1956 = vcmp.eq.s32.totalorder %v1894, 1
      %vm1957 = vcmp.eq.s32.totalorder %v1895, 1
      %vm1958 = vcmp.eq.s32.totalorder %v1896, 1
      %vm1959 = vcmp.eq.s32.totalorder %v1897, 1
      %vm1960 = vcmp.eq.s32.totalorder %v1898, 1
      %vm1961 = vcmp.eq.s32.totalorder %v1899, 1
      %vm1962 = vcmp.eq.s32.totalorder %v1900, 1
      %vm1963 = vcmp.eq.s32.totalorder %v1901, 1
      %vm1964 = vcmp.eq.s32.totalorder %v1902, 1
      %vm1965 = vcmp.eq.s32.totalorder %v1903, 1
      %vm1966 = vcmp.eq.s32.totalorder %v1904, 1
      %vm1967 = vcmp.eq.s32.totalorder %v1905, 1
      %vm1968 = vcmp.eq.s32.totalorder %v1906, 1
      %vm1969 = vcmp.eq.s32.totalorder %v1907, 1
      %vm1970 = vcmp.eq.s32.totalorder %v1908, 1
      %vm1971 = vcmp.eq.s32.totalorder %v1909, 1
      %vm1972 = vcmp.eq.s32.totalorder %v1910, 1
      %vm1973 = vcmp.eq.s32.totalorder %v1911, 1
      %vm1974 = vcmp.eq.s32.totalorder %v1912, 1
      %vm1975 = vcmp.eq.s32.totalorder %v1913, 1
      %vm1976 = vcmp.eq.s32.totalorder %v1914, 1
      %vm1977 = vcmp.eq.s32.totalorder %v1915, 1
      %vm1978 = vcmp.eq.s32.totalorder %v1916, 1
      %vm1979 = vcmp.eq.s32.totalorder %v1917, 1
      %vm1980 = vcmp.eq.s32.totalorder %v1918, 1
      %vm1981 = vcmp.eq.s32.totalorder %v1919, 1
      %vm1982 = vcmp.eq.s32.totalorder %v1920, 1
      %vm1983 = vcmp.eq.s32.totalorder %v1921, 1
      %vm1984 = vcmp.eq.s32.totalorder %v1922, 1
      %vm1985 = vcmp.eq.s32.totalorder %v1923, 1
      %vm1986 = vcmp.eq.s32.totalorder %v1924, 1
      %vm1987 = vcmp.eq.s32.totalorder %v1925, 1
      %vm1988 = vcmp.eq.s32.totalorder %v1926, 1
      %vm1989 = vcmp.eq.s32.totalorder %v1927, 1
      %vm1990 = vcmp.eq.s32.totalorder %v1928, 1
      %vm1991 = vcmp.eq.s32.totalorder %v1929, 1
      %vm1992 = vcmp.eq.s32.totalorder %v1930, 1
      %vm1993 = vcmp.eq.s32.totalorder %v1931, 1
      %vm1994 = vcmp.eq.s32.totalorder %v1932, 1
      %vm1995 = vcmp.eq.s32.totalorder %v1933, 1
      %vm1996 = vcmp.eq.s32.totalorder %v1934, 1
      %vm1997 = vcmp.eq.s32.totalorder %v1935, 1
      %vm1998 = vcmp.eq.s32.totalorder %v1936, 1
      %vm1999 = vcmp.eq.s32.totalorder %v1937, 1
      %vm2000 = vcmp.eq.s32.totalorder %v1938, 1
      %vm2001 = vcmp.eq.s32.totalorder %v1939, 1
      %vm2002 = vcmp.eq.s32.totalorder %v1940, 1
      %vm2003 = vcmp.eq.s32.totalorder %v1941, 1
      %v2004 = vsel %vm1942, %v1689, 0.0
      %v2005 = vsel %vm1943, %v1690, 0.0
      %v2006 = vsel %vm1944, %v1691, 0.0
      %v2007 = vsel %vm1945, %v1692, 0.0
      %v2008 = vsel %vm1946, %v1693, 0.0
      %v2009 = vsel %vm1947, %v1694, 0.0
      %v2010 = vsel %vm1948, %v1695, 0.0
      %v2011 = vsel %vm1949, %v1696, 0.0
      %v2012 = vsel %vm1950, %v1697, 0.0
      %v2013 = vsel %vm1951, %v1698, 0.0
      %v2014 = vsel %vm1952, %v1699, 0.0
      %v2015 = vsel %vm1953, %v1700, 0.0
      %v2016 = vsel %vm1954, %v1701, 0.0
      %v2017 = vsel %vm1955, %v1702, 0.0
      %v2018 = vsel %vm1956, %v1703, 0.0
      %v2019 = vsel %vm1957, %v1704, 0.0
      %v2020 = vsel %vm1958, %v1705, 0.0
      %v2021 = vsel %vm1959, %v1706, 0.0
      %v2022 = vsel %vm1960, %v1707, 0.0
      %v2023 = vsel %vm1961, %v1708, 0.0
      %v2024 = vsel %vm1962, %v1709, 0.0
      %v2025 = vsel %vm1963, %v1710, 0.0
      %v2026 = vsel %vm1964, %v1711, 0.0
      %v2027 = vsel %vm1965, %v1712, 0.0
      %v2028 = vsel %vm1966, %v1713, 0.0
      %v2029 = vsel %vm1967, %v1714, 0.0
      %v2030 = vsel %vm1968, %v1715, 0.0
      %v2031 = vsel %vm1969, %v1716, 0.0
      %v2032 = vsel %vm1970, %v1717, 0.0
      %v2033 = vsel %vm1971, %v1718, 0.0
      %v2034 = vsel %vm1972, %v1719, 0.0
      %v2035 = vsel %vm1973, %v1720, 0.0
      %v2036 = vsel %vm1974, %v1721, 0.0
      %v2037 = vsel %vm1975, %v1722, 0.0
      %v2038 = vsel %vm1976, %v1723, 0.0
      %v2039 = vsel %vm1977, %v1724, 0.0
      %v2040 = vsel %vm1978, %v1725, 0.0
      %v2041 = vsel %vm1979, %v1726, 0.0
      %v2042 = vsel %vm1980, %v1727, 0.0
      %v2043 = vsel %vm1981, %v1728, 0.0
      %v2044 = vsel %vm1982, %v1729, 0.0
      %v2045 = vsel %vm1983, %v1730, 0.0
      %v2046 = vsel %vm1984, %v1731, 0.0
      %v2047 = vsel %vm1985, %v1732, 0.0
      %v2048 = vsel %vm1986, %v1733, 0.0
      %v2049 = vsel %vm1987, %v1734, 0.0
      %v2050 = vsel %vm1988, %v1735, 0.0
      %v2051 = vsel %vm1989, %v1736, 0.0
      %v2052 = vsel %vm1990, %v1737, 0.0
      %v2053 = vsel %vm1991, %v1738, 0.0
      %v2054 = vsel %vm1992, %v1739, 0.0
      %v2055 = vsel %vm1993, %v1740, 0.0
      %v2056 = vsel %vm1994, %v1741, 0.0
      %v2057 = vsel %vm1995, %v1742, 0.0
      %v2058 = vsel %vm1996, %v1743, 0.0
      %v2059 = vsel %vm1997, %v1744, 0.0
      %v2060 = vsel %vm1998, %v1745, 0.0
      %v2061 = vsel %vm1999, %v1746, 0.0
      %v2062 = vsel %vm2000, %v1747, 0.0
      %v2063 = vsel %vm2001, %v1748, 0.0
      %v2064 = vsel %vm2002, %v1749, 0.0
      %v2065 = vsel %vm2003, %v1750, 0.0
      %v2066 = vadd.f32 %v2004, %v2005
      %v2067 = vadd.f32 %v2066, %v2006
      %v2068 = vadd.f32 %v2067, %v2007
      %v2069 = vadd.f32 %v2068, %v2008
      %v2070 = vadd.f32 %v2069, %v2009
      %v2071 = vadd.f32 %v2070, %v2010
      %v2072 = vadd.f32 %v2071, %v2011
      %v2073 = vadd.f32 %v2072, %v2012
      %v2074 = vadd.f32 %v2073, %v2013
      %v2075 = vadd.f32 %v2074, %v2014
      %v2076 = vadd.f32 %v2075, %v2015
      %v2077 = vadd.f32 %v2076, %v2016
      %v2078 = vadd.f32 %v2077, %v2017
      %v2079 = vadd.f32 %v2078, %v2018
      %v2080 = vadd.f32 %v2079, %v2019
      %v2081 = vadd.f32 %v2080, %v2020
      %v2082 = vadd.f32 %v2081, %v2021
      %v2083 = vadd.f32 %v2082, %v2022
      %v2084 = vadd.f32 %v2083, %v2023
      %v2085 = vadd.f32 %v2084, %v2024
      %v2086 = vadd.f32 %v2085, %v2025
      %v2087 = vadd.f32 %v2086, %v2026
      %v2088 = vadd.f32 %v2087, %v2027
      %v2089 = vadd.f32 %v2088, %v2028
      %v2090 = vadd.f32 %v2089, %v2029
      %v2091 = vadd.f32 %v2090, %v2030
      %v2092 = vadd.f32 %v2091, %v2031
      %v2093 = vadd.f32 %v2092, %v2032
      %v2094 = vadd.f32 %v2093, %v2033
      %v2095 = vadd.f32 %v2094, %v2034
      %v2096 = vadd.f32 %v2095, %v2035
      %v2097 = vadd.f32 %v2096, %v2036
      %v2098 = vadd.f32 %v2097, %v2037
      %v2099 = vadd.f32 %v2098, %v2038
      %v2100 = vadd.f32 %v2099, %v2039
      %v2101 = vadd.f32 %v2100, %v2040
      %v2102 = vadd.f32 %v2101, %v2041
      %v2103 = vadd.f32 %v2102, %v2042
      %v2104 = vadd.f32 %v2103, %v2043
      %v2105 = vadd.f32 %v2104, %v2044
      %v2106 = vadd.f32 %v2105, %v2045
      %v2107 = vadd.f32 %v2106, %v2046
      %v2108 = vadd.f32 %v2107, %v2047
      %v2109 = vadd.f32 %v2108, %v2048
      %v2110 = vadd.f32 %v2109, %v2049
      %v2111 = vadd.f32 %v2110, %v2050
      %v2112 = vadd.f32 %v2111, %v2051
      %v2113 = vadd.f32 %v2112, %v2052
      %v2114 = vadd.f32 %v2113, %v2053
      %v2115 = vadd.f32 %v2114, %v2054
      %v2116 = vadd.f32 %v2115, %v2055
      %v2117 = vadd.f32 %v2116, %v2056
      %v2118 = vadd.f32 %v2117, %v2057
      %v2119 = vadd.f32 %v2118, %v2058
      %v2120 = vadd.f32 %v2119, %v2059
      %v2121 = vadd.f32 %v2120, %v2060
      %v2122 = vadd.f32 %v2121, %v2061
      %v2123 = vadd.f32 %v2122, %v2062
      %v2124 = vadd.f32 %v2123, %v2063
      %v2125 = vadd.f32 %v2124, %v2064
      %v2126 = vadd.f32 %v2125, %v2065
      %v2127 = vld [vmem:[%s376] sm:$0xff]
      %v2128 = vadd.f32 %v2127, %v2126
      %2129 = vst [vmem:[%s376] sm:$0xff] %v2128
      %p2130 = scmp.lt.s32.totalorder %s19, 1
      %s2131 = scalar_select %p2130, %s19, 1
      %s2132 = smul.addr %s2131, 8
      %s2133 = scalar_lea.vmem %s4, %s2132
      // Predicated region
      $region41: #{masked_kl_div_loss.1} parent=35 // pred_check
        %p2134 = pneg %p162
      $region42: #{masked_kl_div_loss.1} parent=35 // pred_check_branch
        %2136 = sbr.rel (%p2134) target = $region44
      $region43: #{masked_kl_div_loss.1} parent=35 // pred_region
        _
      $region44: #{masked_kl_div_loss.1} parent=35 // pred_fallthru
        _
    $region36: #{masked_kl_div_loss.1} parent=5 // pred_fallthru
      _
    %p2137 = scmp.le.s32.totalorder 2, %s10
    // Predicated region
    $region45: #{masked_kl_div_loss.1} parent=5 // pred_check
      %p2138 = pneg %p2137
    $region46: #{masked_kl_div_loss.1} parent=5 // pred_check_branch
      %2140 = sbr.rel (%p2138) target = $region48
    $region47: #{masked_kl_div_loss.1} parent=5 // pred_region
      %s2141 = ssub.s32 %s10, 2
      // Predicated region
      $region49: #{masked_kl_div_loss.1} parent=47 // pred_check
        %p2142 = pneg %p168
      $region50: #{masked_kl_div_loss.1} parent=47 // pred_check_branch
        %2144 = sbr.rel (%p2142) target = $region52
      $region51: #{masked_kl_div_loss.1} parent=47 // pred_region
        %p2145 = scmp.lt.s32.totalorder %s21, 1
        %s2146 = scalar_select %p2145, %s21, 1
        %s2147 = smul.addr %s2146, 8
        %s2148 = scalar_lea.vmem %s4, %s2147
      $region52: #{masked_kl_div_loss.1} parent=47 // pred_fallthru
        _
    $region48: #{masked_kl_div_loss.1} parent=5 // pred_fallthru
      _
  $region6: #{masked_kl_div_loss.1} parent=0 // loop_footer
    %s14 = sadd.s32 1, %s10
  $region7: #{masked_kl_div_loss.1} parent=0 // loop_footer_branch
    %9 = sbr.rel target = $region3
  $region8: #{masked_kl_div_loss.1} parent=0 // loop_exit
    _

</llo_original>
